<compile_context>
chip_gen: v6e
topology: v6e:2x2x1
jax: 0.10.0
libtpu: 0.0.40
codegen_flags: <defaults>
</compile_context>

<pallas_src>
import jax
import jax.numpy as jnp
from jax import lax
from jax.experimental import pallas as pl
from jax.experimental.pallas import tpu as pltpu


COMPUTE_DTYPE = jnp.bfloat16   # MXU operand dtype; accumulation stays f32.
OUT_DTYPE = jnp.bfloat16       # HBM output dtype (halves output traffic).


def _make_resblock_kernel(h):
    """Build the fused kernel for images of height `h` (static closure)."""

    def kernel(x_ref, w1_ref, w2_ref, w3_ref, st_ref, o_ref,
               acc_ref, y1_ref, act_ref):
        # x_ref  : (M, W*Cin)          bf16  M = B_tile*H rows (lane-flat NHWC)
        # wX_ref : (3, W*CinX, W*Cout) bf16  banded per-ky conv weights
        # st_ref : (6, W*Cout)         f32   rows = s1,t1,s2,t2,s3,t3
        # o_ref  : (M, W*Cout)         bf16  lane-dense output
        # acc_ref: (M, W*Cout)         f32   scratch accumulator
        # y1_ref : (M, W*Cout)         f32   scratch residual (block-1 output)
        # act_ref: (M, W*Cout)         bf16  scratch inter-block activation
        m = o_ref.shape[0]

        # Row-within-image index.  The masks zero halo taps that would read
        # across an image boundary (and also the roll wrap rows).
        row = lax.broadcasted_iota(jnp.int32, (m, 1), 0) % h
        up_ok = (row >= 1).astype(jnp.float32)       # ky=0 tap (dy = -1)
        dn_ok = (row <= h - 2).astype(jnp.float32)   # ky=2 tap (dy = +1)

        def conv_bn_relu6(act, w_ref, s, t):
            # Center ky tap.
            acc_ref[...] = jnp.dot(act, w_ref[1],
                                   preferred_element_type=jnp.float32)
            # Upper tap: out[m] += x[m-1] @ W0.  Shift the matmul RESULT with
            # the XLU roll instead of slicing a padded activation.
            p = jnp.dot(act, w_ref[0], preferred_element_type=jnp.float32)
            acc_ref[...] += pltpu.roll(p, shift=1, axis=0) * up_ok
            # Lower tap: out[m] += x[m+1] @ W2.
            p = jnp.dot(act, w_ref[2], preferred_element_type=jnp.float32)
            acc_ref[...] += pltpu.roll(p, shift=m - 1, axis=0) * dn_ok
            # Folded (eval-mode) BN + ReLU6 in f32.
            y = acc_ref[...] * s + t
            return jnp.clip(y, 0.0, 6.0)

        # Block 1 (Cin -> Cout).
        y1 = conv_bn_relu6(x_ref[...], w1_ref, st_ref[0:1, :], st_ref[1:2, :])
        y1_ref[...] = y1
        act_ref[...] = y1.astype(act_ref.dtype)
        # Block 2.
        y2 = conv_bn_relu6(act_ref[...], w2_ref, st_ref[2:3, :], st_ref[3:4, :])
        act_ref[...] = y2.astype(act_ref.dtype)
        # Block 3 + residual: relu6(x3 + x1).
        y3 = conv_bn_relu6(act_ref[...], w3_ref, st_ref[4:5, :], st_ref[5:6, :])
        o_ref[...] = jnp.clip(y3 + y1_ref[...], 0.0, 6.0).astype(o_ref.dtype)

    return kernel


def _band_weights(w, width, dtype):
    """(KH, KW, Cin, Cout) conv weights -> (KH, W*Cin, W*Cout) banded matrices.

    big[ky, wi*Cin+ci, wo*Cout+co] = w[ky, kx, ci, co] with wi = wo + kx - pad.
    Out-of-range kx taps (the W-boundary zero padding) are simply absent.
    """
    kh, kw, cin, cout = w.shape
    pad_w = kw // 2
    w32 = w.astype(jnp.float32)
    big = jnp.zeros((kh, width * cin, width * cout), jnp.float32)
    for kx in range(kw):
        shift = kx - pad_w
        sel = jnp.eye(width, k=-shift, dtype=jnp.float32)   # wi == wo + shift
        big = big + jnp.stack(
            [jnp.kron(sel, w32[ky, kx]) for ky in range(kh)], axis=0)
    return big.astype(dtype)


def _fold_bn(bias, gamma, beta, rmean, rvar, eps, width):
    """Fold conv bias + eval-mode BN into per-channel scale/shift, tiled over W."""
    s = gamma / jnp.sqrt(rvar + eps)
    t = beta + s * (bias - rmean)
    return (jnp.tile(s, width).astype(jnp.float32),
            jnp.tile(t, width).astype(jnp.float32))


def _pick_batch_tile(n, h, target_rows=256):
    """Smallest divisor of n whose row count fills the MXU M dim; else whole batch."""
    b = n
    for d in range(1, n + 1):
        if n % d == 0 and d * h >= target_rows:
            b = d
            break
    if (b * h) % 8 != 0:      # keep sublane-aligned blocks; else single block
        b = n
    return b


def _vmem_limit_bytes(m_tile, wc_in, wc_out):
    bf16, f32 = 2, 4
    need = 2 * (m_tile * wc_in * bf16              # x block (double-buffered)
                + 3 * wc_in * wc_out * bf16        # band 1
                + 2 * 3 * wc_out * wc_out * bf16   # bands 2, 3
                + 6 * wc_out * f32                 # packed scale/shift
                + m_tile * wc_out * bf16)          # output block
    need += m_tile * wc_out * (2 * f32 + bf16)     # scratch acc / y1 / act
    # Generous headroom, but never more than 48 MiB (v7x has 64 MiB total).
    return int(min(max(4 * need, 16 * 1024 * 1024), 48 * 1024 * 1024))


def res_block_apply_nhwc(x_nhwc, params, eps=1e-5):
    """Fused resBlcok forward on NHWC activations (preferred entry point)."""
    n, h, w, cin = x_nhwc.shape
    kh, kw, _, cout = params[0]["w"].shape
    assert kh == 3 and kw == 3, "kernel is specialized for 3x3 convs"
    wc_in, wc_out = w * cin, w * cout

    b_tile = _pick_batch_tile(n, h)
    m_tile = b_tile * h
    grid = (n // b_tile,)

    # Lane-flatten (W, C) into lanes; rows are (n, h).
    x = x_nhwc.reshape(n * h, wc_in).astype(COMPUTE_DTYPE)

    bands, st_rows = [], []
    for p in params:
        bands.append(_band_weights(p["w"], w, COMPUTE_DTYPE))
        s, t = _fold_bn(p["b"], p["gamma"], p["beta"], p["rm"], p["rv"], eps, w)
        st_rows += [s, t]
    st = jnp.stack(st_rows, axis=0)                       # (6, W*Cout) f32

    in_specs = [
        pl.BlockSpec((m_tile, wc_in), lambda i: (i, 0)),
        pl.BlockSpec((kh, wc_in, wc_out), lambda i: (0, 0, 0)),
        pl.BlockSpec((kh, wc_out, wc_out), lambda i: (0, 0, 0)),
        pl.BlockSpec((kh, wc_out, wc_out), lambda i: (0, 0, 0)),
        pl.BlockSpec((6, wc_out), lambda i: (0, 0)),
    ]

    out = pl.pallas_call(
        _make_resblock_kernel(h),
        out_shape=jax.ShapeDtypeStruct((n * h, wc_out), OUT_DTYPE),
        grid=grid,
        in_specs=in_specs,
        out_specs=pl.BlockSpec((m_tile, wc_out), lambda i: (i, 0)),
        scratch_shapes=[
            pltpu.VMEM((m_tile, wc_out), jnp.float32),     # accumulator
            pltpu.VMEM((m_tile, wc_out), jnp.float32),     # residual y1
            pltpu.VMEM((m_tile, wc_out), COMPUTE_DTYPE),   # inter-block act
        ],
        compiler_params=pltpu.CompilerParams(
            dimension_semantics=("parallel",),
            vmem_limit_bytes=_vmem_limit_bytes(m_tile, wc_in, wc_out)),
    )(x, bands[0], bands[1], bands[2], st)

    return out.reshape(n, h, w, cout)


def res_block_forward(x_nchw, params, eps=1e-5):
    """PyTorch-interface adapter (NCHW in / NCHW out, bf16 output).

    For chained blocks keep activations in NHWC and call res_block_apply_nhwc
    directly to avoid the two transpose round-trips through HBM."""
    y = res_block_apply_nhwc(jnp.transpose(x_nchw, (0, 2, 3, 1)), params, eps)
    return jnp.transpose(y, (0, 3, 1, 2))


def init_resblock_params(key, ipc, opc):
    """Deterministic synthetic parameters for the 3 CBRBlocks.

    NOTE: weight layout is (KH, KW, Cin, Cout) = HWIO; loading real PyTorch
    Conv2d weights (Cout, Cin, KH, KW) requires a transpose.
    """
    params = []
    cins = [ipc, opc, opc]
    for i in range(3):
        key, k_w, k_b = jax.random.split(key, 3)
        cin = cins[i]
        fan_in = cin * 9
        w = jax.random.normal(k_w, (3, 3, cin, opc), jnp.float32) / jnp.sqrt(
            float(fan_in))
        b = jax.random.normal(k_b, (opc,), jnp.float32) * 0.01
        params.append(dict(
            w=w,
            b=b,
            gamma=jnp.ones((opc,), jnp.float32),
            beta=jnp.zeros((opc,), jnp.float32),
            rm=jnp.zeros((opc,), jnp.float32),
            rv=jnp.ones((opc,), jnp.float32),
        ))
    return params


def _reference_forward(x_nchw, params, eps=1e-5):
    """Pure-JAX reference with the same precision choices (bf16 operands,
    f32 accumulation / epilogue) as the kernel."""
    def q(a):  # emulate bf16 operand storage
        return a.astype(jnp.bfloat16).astype(jnp.float32)

    def cbr(x, p):
        y = lax.conv_general_dilated(
            q(x), q(p["w"]), (1, 1), "SAME",
            dimension_numbers=("NCHW", "HWIO", "NCHW"),
            precision=lax.Precision.HIGHEST)
        s = p["gamma"] / jnp.sqrt(p["rv"] + eps)
        t = p["beta"] + s * (p["b"] - p["rm"])
        y = y * s[None, :, None, None] + t[None, :, None, None]
        return jnp.clip(y, 0.0, 6.0)

    x1 = cbr(x_nchw, params[0])
    x2 = cbr(x1, params[1])
    x3 = cbr(x2, params[2])
    return jnp.clip(x3 + x1, 0.0, 6.0)


if __name__ == "__main__":
    key = jax.random.PRNGKey(0)
    k_x, k_p = jax.random.split(key)

    N, Cin, Cout, H, W = 2, 4, 8, 16, 16
    x = jax.random.normal(k_x, (N, Cin, H, W), jnp.float32)
    params = init_resblock_params(k_p, Cin, Cout)

    out = jax.jit(res_block_forward)(x, params)
    out = jax.block_until_ready(out)

    assert out.shape == (N, Cout, H, W), out.shape
    assert out.dtype == jnp.bfloat16, out.dtype

    out_f32 = out.astype(jnp.float32)
    # ReLU6 output range check.
    assert bool(jnp.all(out_f32 >= 0.0)) and bool(jnp.all(out_f32 <= 6.0))

    # Numerical check against a pure-JAX reference with matching precision
    # (bf16 operands, f32 accumulation; kernel additionally rounds the final
    # output to bf16, which stays well within the tolerance).
    ref = _reference_forward(x, params)
    max_err = float(jnp.max(jnp.abs(out_f32 - ref)))
    assert max_err < 5e-2, f"max abs err vs reference: {max_err}"

    print("KERNEL_OK")
</pallas_src>

<mosaic_0001>
module attributes {stable_mosaic.version = 11 : i64} {
  func.func @kernel(%arg0: i32, %arg1: memref<32x64xbf16, #tpu.memory_space<vmem>>, %arg2: memref<3x64x128xbf16, #tpu.memory_space<vmem>>, %arg3: memref<3x128x128xbf16, #tpu.memory_space<vmem>>, %arg4: memref<3x128x128xbf16, #tpu.memory_space<vmem>>, %arg5: memref<6x128xf32, #tpu.memory_space<vmem>>, %arg6: memref<32x128xbf16, #tpu.memory_space<vmem>>, %arg7: memref<32x128xf32, #tpu.memory_space<vmem>>, %arg8: memref<32x128xf32, #tpu.memory_space<vmem>>, %arg9: memref<32x128xbf16, #tpu.memory_space<vmem>>) attributes {dimension_semantics = [#tpu.dimension_semantics<parallel>], iteration_bounds = array<i64: 1>, scalar_prefetch = 0 : i64, scratch_operands = 3 : i64, tpu.core_type = #tpu.core_type<tc>, window_params = [{transform_indices = @transform_0, window_bounds = array<i64: 32, 64>}, {pipeline_mode = #tpu.pipeline_mode<synchronous>, transform_indices = @transform_1, window_bounds = array<i64: 3, 64, 128>}, {pipeline_mode = #tpu.pipeline_mode<synchronous>, transform_indices = @transform_2, window_bounds = array<i64: 3, 128, 128>}, {pipeline_mode = #tpu.pipeline_mode<synchronous>, transform_indices = @transform_3, window_bounds = array<i64: 3, 128, 128>}, {pipeline_mode = #tpu.pipeline_mode<synchronous>, transform_indices = @transform_4, window_bounds = array<i64: 6, 128>}, {transform_indices = @transform_5, window_bounds = array<i64: 32, 128>}]} {
    %0 = tpu.iota {dimensions = array<i32: 0>} : vector<32x1xi32>
    %c16_i32 = arith.constant 16 : i32
    %c0_i32 = arith.constant 0 : i32
    %1 = arith.cmpi eq, %c16_i32, %c0_i32 : i32
    %c1_i32 = arith.constant 1 : i32
    %2 = arith.select %1, %c1_i32, %c16_i32 : i32
    %3 = vector.broadcast %2 : i32 to vector<32x1xi32>
    %4 = arith.remsi %0, %3 : vector<32x1xi32>
    %c0_i32_0 = arith.constant 0 : i32
    %5 = vector.broadcast %c0_i32_0 : i32 to vector<32x1xi32>
    %6 = arith.cmpi ne, %4, %5 : vector<32x1xi32>
    %c0_i32_1 = arith.constant 0 : i32
    %7 = vector.broadcast %c0_i32_1 : i32 to vector<32x1xi32>
    %8 = arith.cmpi slt, %4, %7 : vector<32x1xi32>
    %c0_i32_2 = arith.constant 0 : i32
    %9 = arith.cmpi slt, %2, %c0_i32_2 : i32
    %10 = vector.broadcast %9 : i1 to vector<32x1xi1>
    %11 = vector.broadcast %10 : vector<32x1xi1> to vector<32x1xi1>
    %12 = arith.xori %8, %11 : vector<32x1xi1>
    %13 = arith.andi %12, %6 : vector<32x1xi1>
    %14 = vector.broadcast %2 : i32 to vector<32x1xi32>
    %15 = arith.addi %4, %14 : vector<32x1xi32>
    %16 = arith.select %13, %15, %4 : vector<32x1xi1>, vector<32x1xi32>
    %c1_i32_3 = arith.constant 1 : i32
    %17 = vector.broadcast %c1_i32_3 : i32 to vector<32x1xi32>
    %18 = arith.cmpi sge, %16, %17 : vector<32x1xi32>
    %19 = arith.extui %18 : vector<32x1xi1> to vector<32x1xi32>
    %20 = arith.sitofp %19 : vector<32x1xi32> to vector<32x1xf32>
    %c14_i32 = arith.constant 14 : i32
    %21 = vector.broadcast %c14_i32 : i32 to vector<32x1xi32>
    %22 = arith.cmpi sle, %16, %21 : vector<32x1xi32>
    %23 = arith.extui %22 : vector<32x1xi1> to vector<32x1xi32>
    %24 = arith.sitofp %23 : vector<32x1xi32> to vector<32x1xf32>
    %c0 = arith.constant 0 : index
    %c0_4 = arith.constant 0 : index
    %25 = vector.load %arg1[%c0, %c0_4] : memref<32x64xbf16, #tpu.memory_space<vmem>>, vector<32x64xbf16>
    %c0_5 = arith.constant 0 : index
    %c0_6 = arith.constant 0 : index
    %26 = vector.load %arg5[%c0_5, %c0_6] : memref<6x128xf32, #tpu.memory_space<vmem>>, vector<1x128xf32>
    %c1 = arith.constant 1 : index
    %c0_7 = arith.constant 0 : index
    %27 = vector.load %arg5[%c1, %c0_7] : memref<6x128xf32, #tpu.memory_space<vmem>>, vector<1x128xf32>
    %c1_8 = arith.constant 1 : index
    %c0_9 = arith.constant 0 : index
    %c0_10 = arith.constant 0 : index
    %28 = vector.load %arg2[%c1_8, %c0_9, %c0_10] : memref<3x64x128xbf16, #tpu.memory_space<vmem>>, vector<1x64x128xbf16>
    %29 = vector.shape_cast %28 : vector<1x64x128xbf16> to vector<64x128xbf16>
    %cst = arith.constant dense<0.000000e+00> : vector<32x128xf32>
    %30 = tpu.matmul %25, %29, %cst {dimension_numbers = #tpu.dot_dimension_numbers<[1], [0], [0], [1], [0, 0, 1, 1], [], []>} : vector<32x64xbf16>, vector<64x128xbf16>, vector<32x128xf32> -> vector<32x128xf32>
    %c0_11 = arith.constant 0 : index
    %c0_12 = arith.constant 0 : index
    %31 = vector.load %arg7[%c0_11, %c0_12] : memref<32x128xf32, #tpu.memory_space<vmem>>, vector<32x128xf32>
    tpu.vector_store %arg7[%c0_11, %c0_12], %30 {strides = array<i32>} : memref<32x128xf32, #tpu.memory_space<vmem>>, vector<32x128xf32>,
    %c0_13 = arith.constant 0 : index
    %c0_14 = arith.constant 0 : index
    %c0_15 = arith.constant 0 : index
    %32 = vector.load %arg2[%c0_13, %c0_14, %c0_15] : memref<3x64x128xbf16, #tpu.memory_space<vmem>>, vector<1x64x128xbf16>
    %33 = vector.shape_cast %32 : vector<1x64x128xbf16> to vector<64x128xbf16>
    %cst_16 = arith.constant dense<0.000000e+00> : vector<32x128xf32>
    %34 = tpu.matmul %25, %33, %cst_16 {dimension_numbers = #tpu.dot_dimension_numbers<[1], [0], [0], [1], [0, 0, 1, 1], [], []>} : vector<32x64xbf16>, vector<64x128xbf16>, vector<32x128xf32> -> vector<32x128xf32>
    %c0_17 = arith.constant 0 : index
    %c0_18 = arith.constant 0 : index
    %35 = vector.load %arg7[%c0_17, %c0_18] : memref<32x128xf32, #tpu.memory_space<vmem>>, vector<32x128xf32>
    %c1_i32_19 = arith.constant 1 : i32
    %36 = tpu.dynamic_rotate %34 by %c1_i32_19 dim 0 : vector<32x128xf32>, i32 -> vector<32x128xf32>
    %37 = vector.broadcast %20 : vector<32x1xf32> to vector<32x128xf32>
    %38 = arith.mulf %36, %37 : vector<32x128xf32>
    %39 = arith.addf %35, %38 : vector<32x128xf32>
    %c0_20 = arith.constant 0 : index
    %c0_21 = arith.constant 0 : index
    %40 = vector.load %arg7[%c0_20, %c0_21] : memref<32x128xf32, #tpu.memory_space<vmem>>, vector<32x128xf32>
    tpu.vector_store %arg7[%c0_20, %c0_21], %39 {strides = array<i32>} : memref<32x128xf32, #tpu.memory_space<vmem>>, vector<32x128xf32>,
    %c2 = arith.constant 2 : index
    %c0_22 = arith.constant 0 : index
    %c0_23 = arith.constant 0 : index
    %41 = vector.load %arg2[%c2, %c0_22, %c0_23] : memref<3x64x128xbf16, #tpu.memory_space<vmem>>, vector<1x64x128xbf16>
    %42 = vector.shape_cast %41 : vector<1x64x128xbf16> to vector<64x128xbf16>
    %cst_24 = arith.constant dense<0.000000e+00> : vector<32x128xf32>
    %43 = tpu.matmul %25, %42, %cst_24 {dimension_numbers = #tpu.dot_dimension_numbers<[1], [0], [0], [1], [0, 0, 1, 1], [], []>} : vector<32x64xbf16>, vector<64x128xbf16>, vector<32x128xf32> -> vector<32x128xf32>
    %c0_25 = arith.constant 0 : index
    %c0_26 = arith.constant 0 : index
    %44 = vector.load %arg7[%c0_25, %c0_26] : memref<32x128xf32, #tpu.memory_space<vmem>>, vector<32x128xf32>
    %c31_i32 = arith.constant 31 : i32
    %45 = tpu.dynamic_rotate %43 by %c31_i32 dim 0 : vector<32x128xf32>, i32 -> vector<32x128xf32>
    %46 = vector.broadcast %24 : vector<32x1xf32> to vector<32x128xf32>
    %47 = arith.mulf %45, %46 : vector<32x128xf32>
    %48 = arith.addf %44, %47 : vector<32x128xf32>
    %c0_27 = arith.constant 0 : index
    %c0_28 = arith.constant 0 : index
    %49 = vector.load %arg7[%c0_27, %c0_28] : memref<32x128xf32, #tpu.memory_space<vmem>>, vector<32x128xf32>
    tpu.vector_store %arg7[%c0_27, %c0_28], %48 {strides = array<i32>} : memref<32x128xf32, #tpu.memory_space<vmem>>, vector<32x128xf32>,
    %c0_29 = arith.constant 0 : index
    %c0_30 = arith.constant 0 : index
    %50 = vector.load %arg7[%c0_29, %c0_30] : memref<32x128xf32, #tpu.memory_space<vmem>>, vector<32x128xf32>
    %51 = vector.broadcast %26 : vector<1x128xf32> to vector<32x128xf32>
    %52 = arith.mulf %50, %51 : vector<32x128xf32>
    %53 = vector.broadcast %27 : vector<1x128xf32> to vector<32x128xf32>
    %54 = arith.addf %52, %53 : vector<32x128xf32>
    %cst_31 = arith.constant 0.000000e+00 : f32
    %cst_32 = arith.constant 6.000000e+00 : f32
    %55 = vector.broadcast %cst_31 : f32 to vector<32x128xf32>
    %56 = arith.maximumf %55, %54 : vector<32x128xf32>
    %57 = vector.broadcast %cst_32 : f32 to vector<32x128xf32>
    %58 = arith.minimumf %57, %56 : vector<32x128xf32>
    %c0_33 = arith.constant 0 : index
    %c0_34 = arith.constant 0 : index
    %59 = vector.load %arg8[%c0_33, %c0_34] : memref<32x128xf32, #tpu.memory_space<vmem>>, vector<32x128xf32>
    tpu.vector_store %arg8[%c0_33, %c0_34], %58 {strides = array<i32>} : memref<32x128xf32, #tpu.memory_space<vmem>>, vector<32x128xf32>,
    %60 = arith.truncf %58 : vector<32x128xf32> to vector<32x128xbf16>
    %c0_35 = arith.constant 0 : index
    %c0_36 = arith.constant 0 : index
    %61 = vector.load %arg9[%c0_35, %c0_36] : memref<32x128xbf16, #tpu.memory_space<vmem>>, vector<32x128xbf16>
    tpu.vector_store %arg9[%c0_35, %c0_36], %60 {strides = array<i32>} : memref<32x128xbf16, #tpu.memory_space<vmem>>, vector<32x128xbf16>,
    %c0_37 = arith.constant 0 : index
    %c0_38 = arith.constant 0 : index
    %62 = vector.load %arg9[%c0_37, %c0_38] : memref<32x128xbf16, #tpu.memory_space<vmem>>, vector<32x128xbf16>
    %c2_39 = arith.constant 2 : index
    %c0_40 = arith.constant 0 : index
    %63 = vector.load %arg5[%c2_39, %c0_40] : memref<6x128xf32, #tpu.memory_space<vmem>>, vector<1x128xf32>
    %c3 = arith.constant 3 : index
    %c0_41 = arith.constant 0 : index
    %64 = vector.load %arg5[%c3, %c0_41] : memref<6x128xf32, #tpu.memory_space<vmem>>, vector<1x128xf32>
    %c1_42 = arith.constant 1 : index
    %c0_43 = arith.constant 0 : index
    %c0_44 = arith.constant 0 : index
    %65 = vector.load %arg3[%c1_42, %c0_43, %c0_44] : memref<3x128x128xbf16, #tpu.memory_space<vmem>>, vector<1x128x128xbf16>
    %66 = vector.shape_cast %65 : vector<1x128x128xbf16> to vector<128x128xbf16>
    %cst_45 = arith.constant dense<0.000000e+00> : vector<32x128xf32>
    %67 = tpu.matmul %62, %66, %cst_45 {dimension_numbers = #tpu.dot_dimension_numbers<[1], [0], [0], [1], [0, 0, 1, 1], [], []>} : vector<32x128xbf16>, vector<128x128xbf16>, vector<32x128xf32> -> vector<32x128xf32>
    %c0_46 = arith.constant 0 : index
    %c0_47 = arith.constant 0 : index
    %68 = vector.load %arg7[%c0_46, %c0_47] : memref<32x128xf32, #tpu.memory_space<vmem>>, vector<32x128xf32>
    tpu.vector_store %arg7[%c0_46, %c0_47], %67 {strides = array<i32>} : memref<32x128xf32, #tpu.memory_space<vmem>>, vector<32x128xf32>,
    %c0_48 = arith.constant 0 : index
    %c0_49 = arith.constant 0 : index
    %c0_50 = arith.constant 0 : index
    %69 = vector.load %arg3[%c0_48, %c0_49, %c0_50] : memref<3x128x128xbf16, #tpu.memory_space<vmem>>, vector<1x128x128xbf16>
    %70 = vector.shape_cast %69 : vector<1x128x128xbf16> to vector<128x128xbf16>
    %cst_51 = arith.constant dense<0.000000e+00> : vector<32x128xf32>
    %71 = tpu.matmul %62, %70, %cst_51 {dimension_numbers = #tpu.dot_dimension_numbers<[1], [0], [0], [1], [0, 0, 1, 1], [], []>} : vector<32x128xbf16>, vector<128x128xbf16>, vector<32x128xf32> -> vector<32x128xf32>
    %c0_52 = arith.constant 0 : index
    %c0_53 = arith.constant 0 : index
    %72 = vector.load %arg7[%c0_52, %c0_53] : memref<32x128xf32, #tpu.memory_space<vmem>>, vector<32x128xf32>
    %c1_i32_54 = arith.constant 1 : i32
    %73 = tpu.dynamic_rotate %71 by %c1_i32_54 dim 0 : vector<32x128xf32>, i32 -> vector<32x128xf32>
    %74 = vector.broadcast %20 : vector<32x1xf32> to vector<32x128xf32>
    %75 = arith.mulf %73, %74 : vector<32x128xf32>
    %76 = arith.addf %72, %75 : vector<32x128xf32>
    %c0_55 = arith.constant 0 : index
    %c0_56 = arith.constant 0 : index
    %77 = vector.load %arg7[%c0_55, %c0_56] : memref<32x128xf32, #tpu.memory_space<vmem>>, vector<32x128xf32>
    tpu.vector_store %arg7[%c0_55, %c0_56], %76 {strides = array<i32>} : memref<32x128xf32, #tpu.memory_space<vmem>>, vector<32x128xf32>,
    %c2_57 = arith.constant 2 : index
    %c0_58 = arith.constant 0 : index
    %c0_59 = arith.constant 0 : index
    %78 = vector.load %arg3[%c2_57, %c0_58, %c0_59] : memref<3x128x128xbf16, #tpu.memory_space<vmem>>, vector<1x128x128xbf16>
    %79 = vector.shape_cast %78 : vector<1x128x128xbf16> to vector<128x128xbf16>
    %cst_60 = arith.constant dense<0.000000e+00> : vector<32x128xf32>
    %80 = tpu.matmul %62, %79, %cst_60 {dimension_numbers = #tpu.dot_dimension_numbers<[1], [0], [0], [1], [0, 0, 1, 1], [], []>} : vector<32x128xbf16>, vector<128x128xbf16>, vector<32x128xf32> -> vector<32x128xf32>
    %c0_61 = arith.constant 0 : index
    %c0_62 = arith.constant 0 : index
    %81 = vector.load %arg7[%c0_61, %c0_62] : memref<32x128xf32, #tpu.memory_space<vmem>>, vector<32x128xf32>
    %c31_i32_63 = arith.constant 31 : i32
    %82 = tpu.dynamic_rotate %80 by %c31_i32_63 dim 0 : vector<32x128xf32>, i32 -> vector<32x128xf32>
    %83 = vector.broadcast %24 : vector<32x1xf32> to vector<32x128xf32>
    %84 = arith.mulf %82, %83 : vector<32x128xf32>
    %85 = arith.addf %81, %84 : vector<32x128xf32>
    %c0_64 = arith.constant 0 : index
    %c0_65 = arith.constant 0 : index
    %86 = vector.load %arg7[%c0_64, %c0_65] : memref<32x128xf32, #tpu.memory_space<vmem>>, vector<32x128xf32>
    tpu.vector_store %arg7[%c0_64, %c0_65], %85 {strides = array<i32>} : memref<32x128xf32, #tpu.memory_space<vmem>>, vector<32x128xf32>,
    %c0_66 = arith.constant 0 : index
    %c0_67 = arith.constant 0 : index
    %87 = vector.load %arg7[%c0_66, %c0_67] : memref<32x128xf32, #tpu.memory_space<vmem>>, vector<32x128xf32>
    %88 = vector.broadcast %63 : vector<1x128xf32> to vector<32x128xf32>
    %89 = arith.mulf %87, %88 : vector<32x128xf32>
    %90 = vector.broadcast %64 : vector<1x128xf32> to vector<32x128xf32>
    %91 = arith.addf %89, %90 : vector<32x128xf32>
    %cst_68 = arith.constant 0.000000e+00 : f32
    %cst_69 = arith.constant 6.000000e+00 : f32
    %92 = vector.broadcast %cst_68 : f32 to vector<32x128xf32>
    %93 = arith.maximumf %92, %91 : vector<32x128xf32>
    %94 = vector.broadcast %cst_69 : f32 to vector<32x128xf32>
    %95 = arith.minimumf %94, %93 : vector<32x128xf32>
    %96 = arith.truncf %95 : vector<32x128xf32> to vector<32x128xbf16>
    %c0_70 = arith.constant 0 : index
    %c0_71 = arith.constant 0 : index
    %97 = vector.load %arg9[%c0_70, %c0_71] : memref<32x128xbf16, #tpu.memory_space<vmem>>, vector<32x128xbf16>
    tpu.vector_store %arg9[%c0_70, %c0_71], %96 {strides = array<i32>} : memref<32x128xbf16, #tpu.memory_space<vmem>>, vector<32x128xbf16>,
    %c0_72 = arith.constant 0 : index
    %c0_73 = arith.constant 0 : index
    %98 = vector.load %arg9[%c0_72, %c0_73] : memref<32x128xbf16, #tpu.memory_space<vmem>>, vector<32x128xbf16>
    %c4 = arith.constant 4 : index
    %c0_74 = arith.constant 0 : index
    %99 = vector.load %arg5[%c4, %c0_74] : memref<6x128xf32, #tpu.memory_space<vmem>>, vector<1x128xf32>
    %c5 = arith.constant 5 : index
    %c0_75 = arith.constant 0 : index
    %100 = vector.load %arg5[%c5, %c0_75] : memref<6x128xf32, #tpu.memory_space<vmem>>, vector<1x128xf32>
    %c1_76 = arith.constant 1 : index
    %c0_77 = arith.constant 0 : index
    %c0_78 = arith.constant 0 : index
    %101 = vector.load %arg4[%c1_76, %c0_77, %c0_78] : memref<3x128x128xbf16, #tpu.memory_space<vmem>>, vector<1x128x128xbf16>
    %102 = vector.shape_cast %101 : vector<1x128x128xbf16> to vector<128x128xbf16>
    %cst_79 = arith.constant dense<0.000000e+00> : vector<32x128xf32>
    %103 = tpu.matmul %98, %102, %cst_79 {dimension_numbers = #tpu.dot_dimension_numbers<[1], [0], [0], [1], [0, 0, 1, 1], [], []>} : vector<32x128xbf16>, vector<128x128xbf16>, vector<32x128xf32> -> vector<32x128xf32>
    %c0_80 = arith.constant 0 : index
    %c0_81 = arith.constant 0 : index
    %104 = vector.load %arg7[%c0_80, %c0_81] : memref<32x128xf32, #tpu.memory_space<vmem>>, vector<32x128xf32>
    tpu.vector_store %arg7[%c0_80, %c0_81], %103 {strides = array<i32>} : memref<32x128xf32, #tpu.memory_space<vmem>>, vector<32x128xf32>,
    %c0_82 = arith.constant 0 : index
    %c0_83 = arith.constant 0 : index
    %c0_84 = arith.constant 0 : index
    %105 = vector.load %arg4[%c0_82, %c0_83, %c0_84] : memref<3x128x128xbf16, #tpu.memory_space<vmem>>, vector<1x128x128xbf16>
    %106 = vector.shape_cast %105 : vector<1x128x128xbf16> to vector<128x128xbf16>
    %cst_85 = arith.constant dense<0.000000e+00> : vector<32x128xf32>
    %107 = tpu.matmul %98, %106, %cst_85 {dimension_numbers = #tpu.dot_dimension_numbers<[1], [0], [0], [1], [0, 0, 1, 1], [], []>} : vector<32x128xbf16>, vector<128x128xbf16>, vector<32x128xf32> -> vector<32x128xf32>
    %c0_86 = arith.constant 0 : index
    %c0_87 = arith.constant 0 : index
    %108 = vector.load %arg7[%c0_86, %c0_87] : memref<32x128xf32, #tpu.memory_space<vmem>>, vector<32x128xf32>
    %c1_i32_88 = arith.constant 1 : i32
    %109 = tpu.dynamic_rotate %107 by %c1_i32_88 dim 0 : vector<32x128xf32>, i32 -> vector<32x128xf32>
    %110 = vector.broadcast %20 : vector<32x1xf32> to vector<32x128xf32>
    %111 = arith.mulf %109, %110 : vector<32x128xf32>
    %112 = arith.addf %108, %111 : vector<32x128xf32>
    %c0_89 = arith.constant 0 : index
    %c0_90 = arith.constant 0 : index
    %113 = vector.load %arg7[%c0_89, %c0_90] : memref<32x128xf32, #tpu.memory_space<vmem>>, vector<32x128xf32>
    tpu.vector_store %arg7[%c0_89, %c0_90], %112 {strides = array<i32>} : memref<32x128xf32, #tpu.memory_space<vmem>>, vector<32x128xf32>,
    %c2_91 = arith.constant 2 : index
    %c0_92 = arith.constant 0 : index
    %c0_93 = arith.constant 0 : index
    %114 = vector.load %arg4[%c2_91, %c0_92, %c0_93] : memref<3x128x128xbf16, #tpu.memory_space<vmem>>, vector<1x128x128xbf16>
    %115 = vector.shape_cast %114 : vector<1x128x128xbf16> to vector<128x128xbf16>
    %cst_94 = arith.constant dense<0.000000e+00> : vector<32x128xf32>
    %116 = tpu.matmul %98, %115, %cst_94 {dimension_numbers = #tpu.dot_dimension_numbers<[1], [0], [0], [1], [0, 0, 1, 1], [], []>} : vector<32x128xbf16>, vector<128x128xbf16>, vector<32x128xf32> -> vector<32x128xf32>
    %c0_95 = arith.constant 0 : index
    %c0_96 = arith.constant 0 : index
    %117 = vector.load %arg7[%c0_95, %c0_96] : memref<32x128xf32, #tpu.memory_space<vmem>>, vector<32x128xf32>
    %c31_i32_97 = arith.constant 31 : i32
    %118 = tpu.dynamic_rotate %116 by %c31_i32_97 dim 0 : vector<32x128xf32>, i32 -> vector<32x128xf32>
    %119 = vector.broadcast %24 : vector<32x1xf32> to vector<32x128xf32>
    %120 = arith.mulf %118, %119 : vector<32x128xf32>
    %121 = arith.addf %117, %120 : vector<32x128xf32>
    %c0_98 = arith.constant 0 : index
    %c0_99 = arith.constant 0 : index
    %122 = vector.load %arg7[%c0_98, %c0_99] : memref<32x128xf32, #tpu.memory_space<vmem>>, vector<32x128xf32>
    tpu.vector_store %arg7[%c0_98, %c0_99], %121 {strides = array<i32>} : memref<32x128xf32, #tpu.memory_space<vmem>>, vector<32x128xf32>,
    %c0_100 = arith.constant 0 : index
    %c0_101 = arith.constant 0 : index
    %123 = vector.load %arg7[%c0_100, %c0_101] : memref<32x128xf32, #tpu.memory_space<vmem>>, vector<32x128xf32>
    %124 = vector.broadcast %99 : vector<1x128xf32> to vector<32x128xf32>
    %125 = arith.mulf %123, %124 : vector<32x128xf32>
    %126 = vector.broadcast %100 : vector<1x128xf32> to vector<32x128xf32>
    %127 = arith.addf %125, %126 : vector<32x128xf32>
    %cst_102 = arith.constant 0.000000e+00 : f32
    %cst_103 = arith.constant 6.000000e+00 : f32
    %128 = vector.broadcast %cst_102 : f32 to vector<32x128xf32>
    %129 = arith.maximumf %128, %127 : vector<32x128xf32>
    %130 = vector.broadcast %cst_103 : f32 to vector<32x128xf32>
    %131 = arith.minimumf %130, %129 : vector<32x128xf32>
    %c0_104 = arith.constant 0 : index
    %c0_105 = arith.constant 0 : index
    %132 = vector.load %arg8[%c0_104, %c0_105] : memref<32x128xf32, #tpu.memory_space<vmem>>, vector<32x128xf32>
    %133 = arith.addf %131, %132 : vector<32x128xf32>
    %cst_106 = arith.constant 0.000000e+00 : f32
    %cst_107 = arith.constant 6.000000e+00 : f32
    %134 = vector.broadcast %cst_106 : f32 to vector<32x128xf32>
    %135 = arith.maximumf %134, %133 : vector<32x128xf32>
    %136 = vector.broadcast %cst_107 : f32 to vector<32x128xf32>
    %137 = arith.minimumf %136, %135 : vector<32x128xf32>
    %138 = arith.truncf %137 : vector<32x128xf32> to vector<32x128xbf16>
    %c0_108 = arith.constant 0 : index
    %c0_109 = arith.constant 0 : index
    %139 = vector.load %arg6[%c0_108, %c0_109] : memref<32x128xbf16, #tpu.memory_space<vmem>>, vector<32x128xbf16>
    tpu.vector_store %arg6[%c0_108, %c0_109], %138 {strides = array<i32>} : memref<32x128xbf16, #tpu.memory_space<vmem>>, vector<32x128xbf16>,
    return
  }
  func.func @transform_0(%arg0: i32) -> (i32, i32) {
    %c0_i32 = arith.constant 0 : i32
    %c0_i32_0 = arith.constant 0 : i32
    return %arg0, %c0_i32 : i32, i32
  }
  func.func @transform_1(%arg0: i32) -> (i32, i32, i32) {
    %c0_i32 = arith.constant 0 : i32
    %c0_i32_0 = arith.constant 0 : i32
    %c0_i32_1 = arith.constant 0 : i32
    %c0_i32_2 = arith.constant 0 : i32
    return %c0_i32, %c0_i32_0, %c0_i32_1 : i32, i32, i32
  }
  func.func @transform_2(%arg0: i32) -> (i32, i32, i32) {
    %c0_i32 = arith.constant 0 : i32
    %c0_i32_0 = arith.constant 0 : i32
    %c0_i32_1 = arith.constant 0 : i32
    %c0_i32_2 = arith.constant 0 : i32
    return %c0_i32, %c0_i32_0, %c0_i32_1 : i32, i32, i32
  }
  func.func @transform_3(%arg0: i32) -> (i32, i32, i32) {
    %c0_i32 = arith.constant 0 : i32
    %c0_i32_0 = arith.constant 0 : i32
    %c0_i32_1 = arith.constant 0 : i32
    %c0_i32_2 = arith.constant 0 : i32
    return %c0_i32, %c0_i32_0, %c0_i32_1 : i32, i32, i32
  }
  func.func @transform_4(%arg0: i32) -> (i32, i32) {
    %c0_i32 = arith.constant 0 : i32
    %c0_i32_0 = arith.constant 0 : i32
    %c0_i32_1 = arith.constant 0 : i32
    return %c0_i32, %c0_i32_0 : i32, i32
  }
  func.func @transform_5(%arg0: i32) -> (i32, i32) {
    %c0_i32 = arith.constant 0 : i32
    %c0_i32_0 = arith.constant 0 : i32
    return %arg0, %c0_i32 : i32, i32
  }
}

</mosaic_0001>

<llo_original>
// kernel: tile.33
$region0: #{tile.33}
  #allocation0 [shape = 's32[1]{0}', space=sflag, size = 0x4, scoped, tag = 'scoped memory for tile.33']
  %s0 = inlined_call_operand.vmem [shape: f32[8], index: 0, kind: input, shape index: {}]
  %s1 = inlined_call_operand.vmem [shape: f32[16,8], index: 1, kind: output, shape index: {}]
  // Predicated region
  $region2: #{tile.33} parent=0 // pred_check
    _
  $region3: #{tile.33} parent=0 // pred_check_branch
    %3 = sbr.rel (0) target = $region5
  $region4: #{tile.33} parent=0 // pred_region
    _
  $region5: #{tile.33} parent=0 // pred_fallthru
    _
  %v4 = vld [vmem:[%s0] ss:$0 sm:$0xff]
  %5 = vst [vmem:[%s1] sm:$0xff] %v4
  %s6 = scalar_lea.vmem %s1, 8
  %7 = vst [vmem:[%s6] sm:$0xff] %v4

// kernel: tile.54
$region0: #{tile.54}
  %s0 = inlined_call_operand.vmem [shape: f32[16,8], index: 0, kind: input, shape index: {}]
  %s1 = inlined_call_operand.vmem [shape: f32[1,128], index: 1, kind: output, shape index: {}]
  $region1: #{tile.54} parent=0
    #allocation0 [shape = 'u8[4096]{0}', space=vmem, size = 0x1000, scoped, tag = 'scoped mem for output reshape']
    %v2 = vld [vmem:[%s0] sm:$0x1]
    %vm3 = vcmask 64512
    %4 = vst.msk [vmem:[#allocation0] sm:$0x1] %vm3, %v2
    %s5 = scalar_lea.vmem %s0, 15
    %v6 = vld [vmem:[%s5] sm:$0x1]
    %7 = vrot.lane.b32.xlu0 %v6, 120
    %v8 = vpop.permute.xlu0 %7
    %vm9 = vcmask 1048512
    %10 = vst.msk [vmem:[#allocation0] sm:$0x1] %vm9, %v8
    %s11 = scalar_lea.vmem %s0, 14
    %v12 = vld [vmem:[%s11] sm:$0x1]
    %13 = vrot.lane.b32.xlu0 %v12, 112
    %v14 = vpop.permute.xlu0 %13
    %vm15 = vcmask 982912
    %16 = vst.msk [vmem:[#allocation0] sm:$0x1] %vm15, %v14
    %s17 = scalar_lea.vmem %s0, 13
    %v18 = vld [vmem:[%s17] sm:$0x1]
    %19 = vrot.lane.b32.xlu0 %v18, 104
    %v20 = vpop.permute.xlu0 %19
    %vm21 = vcmask 917312
    %22 = vst.msk [vmem:[#allocation0] sm:$0x1] %vm21, %v20
    %s23 = scalar_lea.vmem %s0, 12
    %v24 = vld [vmem:[%s23] sm:$0x1]
    %25 = vrot.lane.b32.xlu0 %v24, 96
    %v26 = vpop.permute.xlu0 %25
    %vm27 = vcmask 851712
    %28 = vst.msk [vmem:[#allocation0] sm:$0x1] %vm27, %v26
    %s29 = scalar_lea.vmem %s0, 11
    %v30 = vld [vmem:[%s29] sm:$0x1]
    %31 = vrot.lane.b32.xlu0 %v30, 88
    %v32 = vpop.permute.xlu0 %31
    %vm33 = vcmask 786112
    %34 = vst.msk [vmem:[#allocation0] sm:$0x1] %vm33, %v32
    %s35 = scalar_lea.vmem %s0, 10
    %v36 = vld [vmem:[%s35] sm:$0x1]
    %37 = vrot.lane.b32.xlu0 %v36, 80
    %v38 = vpop.permute.xlu0 %37
    %vm39 = vcmask 720512
    %40 = vst.msk [vmem:[#allocation0] sm:$0x1] %vm39, %v38
    %s41 = scalar_lea.vmem %s0, 9
    %v42 = vld [vmem:[%s41] sm:$0x1]
    %43 = vrot.lane.b32.xlu0 %v42, 72
    %v44 = vpop.permute.xlu0 %43
    %vm45 = vcmask 654912
    %46 = vst.msk [vmem:[#allocation0] sm:$0x1] %vm45, %v44
    %s47 = scalar_lea.vmem %s0, 8
    %v48 = vld [vmem:[%s47] sm:$0x1]
    %49 = vrot.lane.b32.xlu0 %v48, 64
    %v50 = vpop.permute.xlu0 %49
    %vm51 = vcmask 589312
    %52 = vst.msk [vmem:[#allocation0] sm:$0x1] %vm51, %v50
    %s53 = scalar_lea.vmem %s0, 7
    %v54 = vld [vmem:[%s53] sm:$0x1]
    %55 = vrot.lane.b32.xlu0 %v54, 56
    %v56 = vpop.permute.xlu0 %55
    %vm57 = vcmask 523712
    %58 = vst.msk [vmem:[#allocation0] sm:$0x1] %vm57, %v56
    %s59 = scalar_lea.vmem %s0, 6
    %v60 = vld [vmem:[%s59] sm:$0x1]
    %61 = vrot.lane.b32.xlu0 %v60, 48
    %v62 = vpop.permute.xlu0 %61
    %vm63 = vcmask 458112
    %64 = vst.msk [vmem:[#allocation0] sm:$0x1] %vm63, %v62
    %s65 = scalar_lea.vmem %s0, 5
    %v66 = vld [vmem:[%s65] sm:$0x1]
    %67 = vrot.lane.b32.xlu0 %v66, 40
    %v68 = vpop.permute.xlu0 %67
    %vm69 = vcmask 392512
    %70 = vst.msk [vmem:[#allocation0] sm:$0x1] %vm69, %v68
    %s71 = scalar_lea.vmem %s0, 4
    %v72 = vld [vmem:[%s71] sm:$0x1]
    %73 = vrot.lane.b32.xlu0 %v72, 32
    %v74 = vpop.permute.xlu0 %73
    %vm75 = vcmask 326912
    %76 = vst.msk [vmem:[#allocation0] sm:$0x1] %vm75, %v74
    %s77 = scalar_lea.vmem %s0, 3
    %v78 = vld [vmem:[%s77] sm:$0x1]
    %79 = vrot.lane.b32.xlu0 %v78, 24
    %v80 = vpop.permute.xlu0 %79
    %vm81 = vcmask 261312
    %82 = vst.msk [vmem:[#allocation0] sm:$0x1] %vm81, %v80
    %s83 = scalar_lea.vmem %s0, 2
    %v84 = vld [vmem:[%s83] sm:$0x1]
    %85 = vrot.lane.b32.xlu0 %v84, 16
    %v86 = vpop.permute.xlu0 %85
    %vm87 = vcmask 195712
    %88 = vst.msk [vmem:[#allocation0] sm:$0x1] %vm87, %v86
    %s89 = scalar_lea.vmem %s0, 1
    %v90 = vld [vmem:[%s89] sm:$0x1]
    %91 = vrot.lane.b32.xlu0 %v90, 8
    %v92 = vpop.permute.xlu0 %91
    %vm93 = vcmask 130112
    %94 = vst.msk [vmem:[#allocation0] sm:$0x1] %vm93, %v92
    %s96 = sshll.u32 1, 1
    %s97 = ssub.s32 %s96, 1
    %v99 = vld [vmem:[#allocation0] sm:%s97]
    %s100 = sshll.u32 1, 1
    %s101 = ssub.s32 %s100, 1
    %102 = vst [vmem:[%s1] sm:%s101] %v99

// kernel: res_block_forward.1
$region0: #{res_block_forward.1}
  #allocation0 [shape = 'u32[]', space=smem, size = 0x4, offset = 0x4, fixed_abs, tag = 'smem constant byte address 0x4 - core index']
  #allocation1 [shape = 'u32[144,128]{1,0:T(1,128)}', space=vmem, size = 0x12000, scoped, tag = 'internal scratch']
  #allocation2 [shape = 'f32[32,128]{1,0:T(8,128)}', space=vmem, size = 0x4000, scoped, tag = 'scratch operand']
  #allocation3 [shape = 'f32[32,128]{1,0:T(8,128)}', space=vmem, size = 0x4000, scoped, tag = 'scratch operand']
  #allocation4 [shape = 'bf16[32,128]{1,0:T(8,128)(2,1)}', space=vmem, size = 0x2000, scoped, tag = 'scratch operand']
  %s0 = inlined_call_operand.vmem [shape: bf16[32,64], index: 0, kind: input, shape index: {}]
  %s1 = inlined_call_operand.vmem [shape: bf16[3,64,128], index: 1, kind: input, shape index: {}]
  %s2 = inlined_call_operand.vmem [shape: bf16[3,128,128], index: 2, kind: input, shape index: {}]
  %s3 = inlined_call_operand.vmem [shape: bf16[3,128,128], index: 3, kind: input, shape index: {}]
  %s4 = inlined_call_operand.vmem [shape: f32[6,128], index: 4, kind: input, shape index: {}]
  %s5 = inlined_call_operand.vmem [shape: bf16[32,128], index: 5, kind: output, shape index: {}]
  %s6 = sld [smem:[#allocation0]]
  $region30: #{res_block_forward.1} parent=0
    _
  %s8 = ssub.s32 1, %s6
  %s9 = scalar_select 0, %s8, %s6
  // Predicated region
  $region2: #{res_block_forward.1} parent=0 // pred_check
    _
  $region3: #{res_block_forward.1} parent=0 // pred_check_branch
    %11 = sbr.rel (0) target = $region5
  $region4: #{res_block_forward.1} parent=0 // pred_region
    _
  $region5: #{res_block_forward.1} parent=0 // pred_fallthru
    _
  // Predicated region
  $region6: #{res_block_forward.1} parent=0 // pred_check
    _
  $region7: #{res_block_forward.1} parent=0 // pred_check_branch
    %13 = sbr.rel (0) target = $region9
  $region8: #{res_block_forward.1} parent=0 // pred_region
    _
  $region9: #{res_block_forward.1} parent=0 // pred_fallthru
    _
  // Predicated region
  $region10: #{res_block_forward.1} parent=0 // pred_check
    _
  $region11: #{res_block_forward.1} parent=0 // pred_check_branch
    %15 = sbr.rel (0) target = $region13
  $region12: #{res_block_forward.1} parent=0 // pred_region
    _
  $region13: #{res_block_forward.1} parent=0 // pred_fallthru
    _
  // Predicated region
  $region14: #{res_block_forward.1} parent=0 // pred_check
    _
  $region15: #{res_block_forward.1} parent=0 // pred_check_branch
    %17 = sbr.rel (0) target = $region17
  $region16: #{res_block_forward.1} parent=0 // pred_region
    _
  $region17: #{res_block_forward.1} parent=0 // pred_fallthru
    _
  // Predicated region
  $region18: #{res_block_forward.1} parent=0 // pred_check
    _
  $region19: #{res_block_forward.1} parent=0 // pred_check_branch
    %19 = sbr.rel (0) target = $region21
  $region20: #{res_block_forward.1} parent=0 // pred_region
    _
  $region21: #{res_block_forward.1} parent=0 // pred_fallthru
    _
  %v21 = vlaneseq
  %v22 = vshrl.u32 %v21, 7
  %v23 = vadd.s32 %v22, 8
  %v24 = vadd.s32 %v22, 16
  %v25 = vadd.s32 %v22, 24
  %vm26 = vcmp.lt.s32.totalorder %v22, 0
  %v27 = vsub.s32 0, %v22
  %v28 = vsel %vm26, %v27, %v22
  %v29 = vshrl.u32 %v28, 4
  %v30 = vand.u32 %v28, 15
  %v31 = vsub.s32 0, %v30
  %v32 = vsel %vm26, %v31, %v30
  %vm33 = vcmp.lt.s32.totalorder %v23, 0
  %v34 = vsub.s32 0, %v23
  %v35 = vsel %vm33, %v34, %v23
  %v36 = vshrl.u32 %v35, 4
  %v37 = vand.u32 %v35, 15
  %v38 = vsub.s32 0, %v37
  %v39 = vsel %vm33, %v38, %v37
  %vm40 = vcmp.lt.s32.totalorder %v24, 0
  %v41 = vsub.s32 0, %v24
  %v42 = vsel %vm40, %v41, %v24
  %v43 = vshrl.u32 %v42, 4
  %v44 = vand.u32 %v42, 15
  %v45 = vsub.s32 0, %v44
  %v46 = vsel %vm40, %v45, %v44
  %vm47 = vcmp.lt.s32.totalorder %v25, 0
  %v48 = vsub.s32 0, %v25
  %v49 = vsel %vm47, %v48, %v25
  %v50 = vshrl.u32 %v49, 4
  %v51 = vand.u32 %v49, 15
  %v52 = vsub.s32 0, %v51
  %v53 = vsel %vm47, %v52, %v51
  %vm54 = vcmp.ne.s32.totalorder %v32, 0
  %vm55 = vcmp.ne.s32.totalorder %v39, 0
  %vm56 = vcmp.ne.s32.totalorder %v46, 0
  %vm57 = vcmp.ne.s32.totalorder %v53, 0
  %vm58 = vcmp.lt.s32.totalorder %v32, 0
  %vm59 = vcmp.lt.s32.totalorder %v39, 0
  %vm60 = vcmp.lt.s32.totalorder %v46, 0
  %vm61 = vcmp.lt.s32.totalorder %v53, 0
  %vm62 = vmand %vm58, %vm54
  %vm63 = vmand %vm59, %vm55
  %vm64 = vmand %vm60, %vm56
  %vm65 = vmand %vm61, %vm57
  %v66 = vadd.s32 %v32, 16
  %v67 = vadd.s32 %v39, 16
  %v68 = vadd.s32 %v46, 16
  %v69 = vadd.s32 %v53, 16
  %v70 = vsel %vm62, %v66, %v32
  %v71 = vsel %vm63, %v67, %v39
  %v72 = vsel %vm64, %v68, %v46
  %v73 = vsel %vm65, %v69, %v53
  %vm74 = vcmp.ge.s32.totalorder %v70, 1
  %vm75 = vcmp.ge.s32.totalorder %v71, 1
  %vm76 = vcmp.ge.s32.totalorder %v72, 1
  %vm77 = vcmp.ge.s32.totalorder %v73, 1
  %v78 = vsel %vm74, 1, 0
  %v79 = vsel %vm75, 1, 0
  %v80 = vsel %vm76, 1, 0
  %v81 = vsel %vm77, 1, 0
  %v82 = vcvt.s32.f32 %v78
  %v83 = vcvt.s32.f32 %v79
  %v84 = vcvt.s32.f32 %v80
  %v85 = vcvt.s32.f32 %v81
  %vm86 = vcmp.le.s32.totalorder %v70, 14
  %vm87 = vcmp.le.s32.totalorder %v71, 14
  %vm88 = vcmp.le.s32.totalorder %v72, 14
  %vm89 = vcmp.le.s32.totalorder %v73, 14
  %v90 = vsel %vm86, 1, 0
  %v91 = vsel %vm87, 1, 0
  %v92 = vsel %vm88, 1, 0
  %v93 = vsel %vm89, 1, 0
  %v94 = vcvt.s32.f32 %v90
  %v95 = vcvt.s32.f32 %v91
  %v96 = vcvt.s32.f32 %v92
  %v97 = vcvt.s32.f32 %v93
  %v98 = vld [vmem:[%s0] sm:$0xf]
  %v99 = vld [vmem:[%s0 + $0x4] sm:$0xf]
  %v100 = vld [vmem:[%s0 + $0x8] sm:$0xf]
  %v101 = vld [vmem:[%s0 + $0xc] sm:$0xf]
  %v102 = vld [vmem:[%s4] sm:$0x1]
  %v103 = vld [vmem:[%s4 + $0x1] sm:$0x1]
  %s104 = scalar_lea.vmem %s1, 32
  %v105 = vld [vmem:[%s104] sm:$0xf]
  %v106 = vld [vmem:[%s104 + $0x4] sm:$0xf]
  %v107 = vld [vmem:[%s104 + $0x8] sm:$0xf]
  %v108 = vld [vmem:[%s104 + $0xc] sm:$0xf]
  %v109 = vld [vmem:[%s104 + $0x10] sm:$0xf]
  %v110 = vld [vmem:[%s104 + $0x14] sm:$0xf]
  %v111 = vld [vmem:[%s104 + $0x18] sm:$0xf]
  %v112 = vld [vmem:[%s104 + $0x1c] sm:$0xf]
  %v117 = vunpack.c.l.b16 %v98
  %v118 = vunpack.c.l.b16 %v99
  %v119 = vunpack.c.l.b16 %v100
  %v120 = vunpack.c.l.b16 %v101
  %v121 = vpack.c.b16 %v118, %v117
  %v122 = vpack.c.b16 %v120, %v119
  %v131 = vunpack.c.l.b16 %v105
  %v132 = vunpack.c.l.b16 %v106
  %v133 = vunpack.c.l.b16 %v107
  %v134 = vunpack.c.l.b16 %v108
  %v135 = vunpack.c.l.b16 %v109
  %v136 = vunpack.c.l.b16 %v110
  %v137 = vunpack.c.l.b16 %v111
  %v138 = vunpack.c.l.b16 %v112
  %v139 = vpack.c.b16 %v132, %v131
  %v140 = vpack.c.b16 %v134, %v133
  %v141 = vpack.c.b16 %v136, %v135
  %v142 = vpack.c.b16 %v138, %v137
  %vm147 = vcmask 523264
  %v149 = vsel %vm147, %v121, 0
  %v152 = vsel %vm147, %v122, 0
  %154 = vmatprep.subr.bf16.mxu0 0
  %155 = vmatpush1.bf16.msra.mxu0 0
  %156 = vmatprep.subr.bf16.mxu0 0
  %157 = vmatpush1.bf16.msra.mxu0 0
  %158 = vmatprep.subr.bf16.mxu0 0
  %159 = vmatpush1.bf16.msra.mxu0 0
  %160 = vmatprep.subr.bf16.mxu0 0
  %161 = vmatpush1.bf16.msra.mxu0 0
  %162 = vmatprep.subr.bf16.mxu0 0
  %163 = vmatpush1.bf16.msra.mxu0 %v142
  %164 = vmatprep.subr.bf16.mxu0 0
  %165 = vmatpush1.bf16.msra.mxu0 %v141
  %166 = vmatprep.subr.bf16.mxu0 0
  %167 = vmatpush1.bf16.msra.mxu0 %v140
  %168 = vmatprep.subr.bf16.mxu0 0
  %169 = vmatpush1.bf16.msra.mxu0 %v139
  %170 = vmatprep.subr.bf16.mxu0 0
  %171 = vmatpush2.bf16.msra.mxu0 0
  %172 = vmatprep.subr.bf16.mxu0 0
  %173 = vmatpush2.bf16.msra.mxu0 0
  %174 = vmatprep.subr.bf16.mxu0 0
  %175 = vmatpush2.bf16.msra.mxu0 0
  %176 = vmatprep.subr.bf16.mxu0 0
  %177 = vmatpush2.bf16.msra.mxu0 0
  %178 = vmatprep.subr.bf16.mxu0 0
  %179 = vmatpush2.bf16.msra.mxu0 0
  %180 = vmatprep.subr.bf16.mxu0 0
  %181 = vmatpush2.bf16.msra.mxu0 0
  %182 = vmatprep.subr.bf16.mxu0 0
  %183 = vmatpush2.bf16.msra.mxu0 0
  %184 = vmatprep.subr.bf16.mxu0 0
  %185 = vmatpush2.bf16.msra.mxu0 0
  %186 = vmatprep.mubr.bf16.mxu0 0
  %187 = vmatmul.mubr.bf16.gmra.mxu0 %v149
  %v188 = vpop.f32.mrf.mxu0
  %v189 = vadd.f32 0.0, %v188
  %v190 = vpop.f32.mrf.mxu0
  %v191 = vpop.f32.mrf.mxu0
  %v192 = vadd.f32 0.0, %v191
  %v193 = vpop.f32.mrf.mxu0
  %194 = vmatprep.mubr.bf16.mxu0 0
  %195 = vmatmul.mubr.bf16.gmra.mxu0 %v152
  %v196 = vpop.f32.mrf.mxu0
  %v197 = vadd.f32 0.0, %v196
  %v198 = vpop.f32.mrf.mxu0
  %v199 = vpop.f32.mrf.mxu0
  %v200 = vadd.f32 0.0, %v199
  %v201 = vpop.f32.mrf.mxu0
  %202 = vdwg.mxu0
  %203 = vst [vmem:[#allocation2] sm:$0xff] %v189
  %204 = vst [vmem:[#allocation2 + $0x8] sm:$0xff] %v192
  %205 = vst [vmem:[#allocation2 + $0x10] sm:$0xff] %v197
  %206 = vst [vmem:[#allocation2 + $0x18] sm:$0xff] %v200
  %v207 = vld [vmem:[%s1] sm:$0xf]
  %v208 = vld [vmem:[%s1 + $0x4] sm:$0xf]
  %v209 = vld [vmem:[%s1 + $0x8] sm:$0xf]
  %v210 = vld [vmem:[%s1 + $0xc] sm:$0xf]
  %v211 = vld [vmem:[%s1 + $0x10] sm:$0xf]
  %v212 = vld [vmem:[%s1 + $0x14] sm:$0xf]
  %v213 = vld [vmem:[%s1 + $0x18] sm:$0xf]
  %v214 = vld [vmem:[%s1 + $0x1c] sm:$0xf]
  %v223 = vunpack.c.l.b16 %v207
  %v224 = vunpack.c.l.b16 %v208
  %v225 = vunpack.c.l.b16 %v209
  %v226 = vunpack.c.l.b16 %v210
  %v227 = vunpack.c.l.b16 %v211
  %v228 = vunpack.c.l.b16 %v212
  %v229 = vunpack.c.l.b16 %v213
  %v230 = vunpack.c.l.b16 %v214
  %v231 = vpack.c.b16 %v224, %v223
  %v232 = vpack.c.b16 %v226, %v225
  %v233 = vpack.c.b16 %v228, %v227
  %v234 = vpack.c.b16 %v230, %v229
  %239 = vmatprep.subr.bf16.mxu0 0
  %240 = vmatpush1.bf16.msra.mxu0 0
  %241 = vmatprep.subr.bf16.mxu0 0
  %242 = vmatpush1.bf16.msra.mxu0 0
  %243 = vmatprep.subr.bf16.mxu0 0
  %244 = vmatpush1.bf16.msra.mxu0 0
  %245 = vmatprep.subr.bf16.mxu0 0
  %246 = vmatpush1.bf16.msra.mxu0 0
  %247 = vmatprep.subr.bf16.mxu0 0
  %248 = vmatpush1.bf16.msra.mxu0 %v234
  %249 = vmatprep.subr.bf16.mxu0 0
  %250 = vmatpush1.bf16.msra.mxu0 %v233
  %251 = vmatprep.subr.bf16.mxu0 0
  %252 = vmatpush1.bf16.msra.mxu0 %v232
  %253 = vmatprep.subr.bf16.mxu0 0
  %254 = vmatpush1.bf16.msra.mxu0 %v231
  %255 = vmatprep.subr.bf16.mxu0 0
  %256 = vmatpush2.bf16.msra.mxu0 0
  %257 = vmatprep.subr.bf16.mxu0 0
  %258 = vmatpush2.bf16.msra.mxu0 0
  %259 = vmatprep.subr.bf16.mxu0 0
  %260 = vmatpush2.bf16.msra.mxu0 0
  %261 = vmatprep.subr.bf16.mxu0 0
  %262 = vmatpush2.bf16.msra.mxu0 0
  %263 = vmatprep.subr.bf16.mxu0 0
  %264 = vmatpush2.bf16.msra.mxu0 0
  %265 = vmatprep.subr.bf16.mxu0 0
  %266 = vmatpush2.bf16.msra.mxu0 0
  %267 = vmatprep.subr.bf16.mxu0 0
  %268 = vmatpush2.bf16.msra.mxu0 0
  %269 = vmatprep.subr.bf16.mxu0 0
  %270 = vmatpush2.bf16.msra.mxu0 0
  %271 = vmatprep.mubr.bf16.mxu0 0
  %272 = vmatmul.mubr.bf16.gmra.mxu0 %v149
  %v273 = vpop.f32.mrf.mxu0
  %v274 = vadd.f32 0.0, %v273
  %v275 = vpop.f32.mrf.mxu0
  %v276 = vpop.f32.mrf.mxu0
  %v277 = vadd.f32 0.0, %v276
  %v278 = vpop.f32.mrf.mxu0
  %279 = vmatprep.mubr.bf16.mxu0 0
  %280 = vmatmul.mubr.bf16.gmra.mxu0 %v152
  %v281 = vpop.f32.mrf.mxu0
  %v282 = vadd.f32 0.0, %v281
  %v283 = vpop.f32.mrf.mxu0
  %v284 = vpop.f32.mrf.mxu0
  %v285 = vadd.f32 0.0, %v284
  %v286 = vpop.f32.mrf.mxu0
  %287 = vdwg.mxu0
  %v288 = vld [vmem:[#allocation2] sm:$0xff]
  %v289 = vld [vmem:[#allocation2 + $0x8] sm:$0xff]
  %v290 = vld [vmem:[#allocation2 + $0x10] sm:$0xff]
  %v291 = vld [vmem:[#allocation2 + $0x18] sm:$0xff]
  %v292 = vrot.slane %v274, 7
  %v293 = vrot.slane %v277, 7
  %v294 = vrot.slane %v282, 7
  %v295 = vrot.slane %v285, 7
  %vm296 = vcmp.lt.s32.totalorder %v22, 1
  %v297 = vsel %vm296, %v294, %v295
  %v298 = vsel %vm296, %v293, %v294
  %v299 = vsel %vm296, %v292, %v293
  %v300 = vsel %vm296, %v295, %v292
  %v301 = vmul.f32 %v300, %v82
  %v302 = vmul.f32 %v299, %v83
  %v303 = vmul.f32 %v298, %v84
  %v304 = vmul.f32 %v297, %v85
  %v305 = vadd.f32 %v288, %v301
  %v306 = vadd.f32 %v289, %v302
  %v307 = vadd.f32 %v290, %v303
  %v308 = vadd.f32 %v291, %v304
  %309 = vst [vmem:[#allocation2] sm:$0xff] %v305
  %310 = vst [vmem:[#allocation2 + $0x8] sm:$0xff] %v306
  %311 = vst [vmem:[#allocation2 + $0x10] sm:$0xff] %v307
  %312 = vst [vmem:[#allocation2 + $0x18] sm:$0xff] %v308
  %s313 = scalar_lea.vmem %s1, 64
  %v314 = vld [vmem:[%s313] sm:$0xf]
  %v315 = vld [vmem:[%s313 + $0x4] sm:$0xf]
  %v316 = vld [vmem:[%s313 + $0x8] sm:$0xf]
  %v317 = vld [vmem:[%s313 + $0xc] sm:$0xf]
  %v318 = vld [vmem:[%s313 + $0x10] sm:$0xf]
  %v319 = vld [vmem:[%s313 + $0x14] sm:$0xf]
  %v320 = vld [vmem:[%s313 + $0x18] sm:$0xf]
  %v321 = vld [vmem:[%s313 + $0x1c] sm:$0xf]
  %v330 = vunpack.c.l.b16 %v314
  %v331 = vunpack.c.l.b16 %v315
  %v332 = vunpack.c.l.b16 %v316
  %v333 = vunpack.c.l.b16 %v317
  %v334 = vunpack.c.l.b16 %v318
  %v335 = vunpack.c.l.b16 %v319
  %v336 = vunpack.c.l.b16 %v320
  %v337 = vunpack.c.l.b16 %v321
  %v338 = vpack.c.b16 %v331, %v330
  %v339 = vpack.c.b16 %v333, %v332
  %v340 = vpack.c.b16 %v335, %v334
  %v341 = vpack.c.b16 %v337, %v336
  %346 = vmatprep.subr.bf16.mxu0 0
  %347 = vmatpush1.bf16.msra.mxu0 0
  %348 = vmatprep.subr.bf16.mxu0 0
  %349 = vmatpush1.bf16.msra.mxu0 0
  %350 = vmatprep.subr.bf16.mxu0 0
  %351 = vmatpush1.bf16.msra.mxu0 0
  %352 = vmatprep.subr.bf16.mxu0 0
  %353 = vmatpush1.bf16.msra.mxu0 0
  %354 = vmatprep.subr.bf16.mxu0 0
  %355 = vmatpush1.bf16.msra.mxu0 %v341
  %356 = vmatprep.subr.bf16.mxu0 0
  %357 = vmatpush1.bf16.msra.mxu0 %v340
  %358 = vmatprep.subr.bf16.mxu0 0
  %359 = vmatpush1.bf16.msra.mxu0 %v339
  %360 = vmatprep.subr.bf16.mxu0 0
  %361 = vmatpush1.bf16.msra.mxu0 %v338
  %362 = vmatprep.subr.bf16.mxu0 0
  %363 = vmatpush2.bf16.msra.mxu0 0
  %364 = vmatprep.subr.bf16.mxu0 0
  %365 = vmatpush2.bf16.msra.mxu0 0
  %366 = vmatprep.subr.bf16.mxu0 0
  %367 = vmatpush2.bf16.msra.mxu0 0
  %368 = vmatprep.subr.bf16.mxu0 0
  %369 = vmatpush2.bf16.msra.mxu0 0
  %370 = vmatprep.subr.bf16.mxu0 0
  %371 = vmatpush2.bf16.msra.mxu0 0
  %372 = vmatprep.subr.bf16.mxu0 0
  %373 = vmatpush2.bf16.msra.mxu0 0
  %374 = vmatprep.subr.bf16.mxu0 0
  %375 = vmatpush2.bf16.msra.mxu0 0
  %376 = vmatprep.subr.bf16.mxu0 0
  %377 = vmatpush2.bf16.msra.mxu0 0
  %378 = vmatprep.mubr.bf16.mxu0 0
  %379 = vmatmul.mubr.bf16.gmra.mxu0 %v149
  %v380 = vpop.f32.mrf.mxu0
  %v381 = vadd.f32 0.0, %v380
  %v382 = vpop.f32.mrf.mxu0
  %v383 = vpop.f32.mrf.mxu0
  %v384 = vadd.f32 0.0, %v383
  %v385 = vpop.f32.mrf.mxu0
  %386 = vmatprep.mubr.bf16.mxu0 0
  %387 = vmatmul.mubr.bf16.gmra.mxu0 %v152
  %v388 = vpop.f32.mrf.mxu0
  %v389 = vadd.f32 0.0, %v388
  %v390 = vpop.f32.mrf.mxu0
  %v391 = vpop.f32.mrf.mxu0
  %v392 = vadd.f32 0.0, %v391
  %v393 = vpop.f32.mrf.mxu0
  %394 = vdwg.mxu0
  %v395 = vld [vmem:[#allocation2] sm:$0xff]
  %v396 = vld [vmem:[#allocation2 + $0x8] sm:$0xff]
  %v397 = vld [vmem:[#allocation2 + $0x10] sm:$0xff]
  %v398 = vld [vmem:[#allocation2 + $0x18] sm:$0xff]
  %v399 = vrot.slane %v381, 1
  %v400 = vrot.slane %v384, 1
  %v401 = vrot.slane %v389, 1
  %v402 = vrot.slane %v392, 1
  %vm403 = vcmp.lt.s32.totalorder %v22, 7
  %v404 = vsel %vm403, %v401, %v402
  %v405 = vsel %vm403, %v400, %v401
  %v406 = vsel %vm403, %v399, %v400
  %v407 = vsel %vm403, %v402, %v399
  %v408 = vmul.f32 %v406, %v94
  %v409 = vmul.f32 %v405, %v95
  %v410 = vmul.f32 %v404, %v96
  %v411 = vmul.f32 %v407, %v97
  %v412 = vadd.f32 %v395, %v408
  %v413 = vadd.f32 %v396, %v409
  %v414 = vadd.f32 %v397, %v410
  %v415 = vadd.f32 %v398, %v411
  %416 = vst [vmem:[#allocation2] sm:$0xff] %v412
  %417 = vst [vmem:[#allocation2 + $0x8] sm:$0xff] %v413
  %418 = vst [vmem:[#allocation2 + $0x10] sm:$0xff] %v414
  %419 = vst [vmem:[#allocation2 + $0x18] sm:$0xff] %v415
  %v420 = vld [vmem:[#allocation2] sm:$0xff]
  %v421 = vld [vmem:[#allocation2 + $0x8] sm:$0xff]
  %v422 = vld [vmem:[#allocation2 + $0x10] sm:$0xff]
  %v423 = vld [vmem:[#allocation2 + $0x18] sm:$0xff]
  %v424 = vlaneseq
  %v425 = vshrl.u32 %v424, 7
  %v426 = vsub.s32 0, %v425
  %v427 = vrot.slane %v102, %v426
  %v428 = vmul.f32 %v420, %v427
  %v429 = vmul.f32 %v421, %v427
  %v430 = vmul.f32 %v422, %v427
  %v431 = vmul.f32 %v423, %v427
  %v432 = vlaneseq
  %v433 = vshrl.u32 %v432, 7
  %v434 = vsub.s32 0, %v433
  %v435 = vrot.slane %v103, %v434
  %v436 = vadd.f32 %v428, %v435
  %v437 = vadd.f32 %v429, %v435
  %v438 = vadd.f32 %v430, %v435
  %v439 = vadd.f32 %v431, %v435
  %v440 = vmax.f32 %v436, 0.0
  %v441 = vmax.f32 %v437, 0.0
  %v442 = vmax.f32 %v438, 0.0
  %v443 = vmax.f32 %v439, 0.0
  %v444 = vmin.f32 %v440, 6.0
  %v445 = vmin.f32 %v441, 6.0
  %v446 = vmin.f32 %v442, 6.0
  %v447 = vmin.f32 %v443, 6.0
  %448 = vst [vmem:[#allocation3] sm:$0xff] %v444
  %449 = vst [vmem:[#allocation3 + $0x8] sm:$0xff] %v445
  %450 = vst [vmem:[#allocation3 + $0x10] sm:$0xff] %v446
  %451 = vst [vmem:[#allocation3 + $0x18] sm:$0xff] %v447
  %v452 = vpack.c.bf16 %v445, %v444
  %v453 = vpack.c.bf16 %v447, %v446
  %v456 = vunpack.c.l.b16 %v452
  %v457 = vunpack.c.h.b16 %v452
  %v458 = vunpack.c.l.b16 %v453
  %v459 = vunpack.c.h.b16 %v453
  %v460 = vpack.c.b16 %v456, %v456
  %v461 = vpack.c.b16 %v457, %v457
  %v462 = vpack.c.b16 %v458, %v458
  %v463 = vpack.c.b16 %v459, %v459
  %468 = vst [vmem:[#allocation4] sm:$0xf] %v460
  %469 = vst [vmem:[#allocation4 + $0x4] sm:$0xf] %v461
  %470 = vst [vmem:[#allocation4 + $0x8] sm:$0xf] %v462
  %471 = vst [vmem:[#allocation4 + $0xc] sm:$0xf] %v463
  %v472 = vld [vmem:[#allocation4] sm:$0xf]
  %v473 = vld [vmem:[#allocation4 + $0x4] sm:$0xf]
  %v474 = vld [vmem:[#allocation4 + $0x8] sm:$0xf]
  %v475 = vld [vmem:[#allocation4 + $0xc] sm:$0xf]
  %v476 = vld [vmem:[%s4 + $0x2] sm:$0x1]
  %v477 = vld [vmem:[%s4 + $0x3] sm:$0x1]
  %s478 = scalar_lea.vmem %s2, 64
  %v479 = vld [vmem:[%s478] sm:$0xf]
  %v480 = vld [vmem:[%s478 + $0x4] sm:$0xf]
  %v481 = vld [vmem:[%s478 + $0x8] sm:$0xf]
  %v482 = vld [vmem:[%s478 + $0xc] sm:$0xf]
  %v483 = vld [vmem:[%s478 + $0x10] sm:$0xf]
  %v484 = vld [vmem:[%s478 + $0x14] sm:$0xf]
  %v485 = vld [vmem:[%s478 + $0x18] sm:$0xf]
  %v486 = vld [vmem:[%s478 + $0x1c] sm:$0xf]
  %v487 = vld [vmem:[%s478 + $0x20] sm:$0xf]
  %v488 = vld [vmem:[%s478 + $0x24] sm:$0xf]
  %v489 = vld [vmem:[%s478 + $0x28] sm:$0xf]
  %v490 = vld [vmem:[%s478 + $0x2c] sm:$0xf]
  %v491 = vld [vmem:[%s478 + $0x30] sm:$0xf]
  %v492 = vld [vmem:[%s478 + $0x34] sm:$0xf]
  %v493 = vld [vmem:[%s478 + $0x38] sm:$0xf]
  %v494 = vld [vmem:[%s478 + $0x3c] sm:$0xf]
  %v499 = vunpack.c.l.b16 %v472
  %v500 = vunpack.c.l.b16 %v473
  %v501 = vunpack.c.l.b16 %v474
  %v502 = vunpack.c.l.b16 %v475
  %v503 = vpack.c.b16 %v500, %v499
  %v504 = vpack.c.b16 %v502, %v501
  %v523 = vunpack.c.l.b16 %v479
  %v524 = vunpack.c.l.b16 %v480
  %v525 = vunpack.c.l.b16 %v481
  %v526 = vunpack.c.l.b16 %v482
  %v527 = vunpack.c.l.b16 %v483
  %v528 = vunpack.c.l.b16 %v484
  %v529 = vunpack.c.l.b16 %v485
  %v530 = vunpack.c.l.b16 %v486
  %v531 = vunpack.c.l.b16 %v487
  %v532 = vunpack.c.l.b16 %v488
  %v533 = vunpack.c.l.b16 %v489
  %v534 = vunpack.c.l.b16 %v490
  %v535 = vunpack.c.l.b16 %v491
  %v536 = vunpack.c.l.b16 %v492
  %v537 = vunpack.c.l.b16 %v493
  %v538 = vunpack.c.l.b16 %v494
  %v539 = vpack.c.b16 %v524, %v523
  %v540 = vpack.c.b16 %v526, %v525
  %v541 = vpack.c.b16 %v528, %v527
  %v542 = vpack.c.b16 %v530, %v529
  %v543 = vpack.c.b16 %v532, %v531
  %v544 = vpack.c.b16 %v534, %v533
  %v545 = vpack.c.b16 %v536, %v535
  %v546 = vpack.c.b16 %v538, %v537
  %555 = vmatprep.subr.bf16.mxu0 0
  %556 = vmatpush1.bf16.msra.mxu0 %v546
  %557 = vmatprep.subr.bf16.mxu0 0
  %558 = vmatpush1.bf16.msra.mxu0 %v545
  %559 = vmatprep.subr.bf16.mxu0 0
  %560 = vmatpush1.bf16.msra.mxu0 %v544
  %561 = vmatprep.subr.bf16.mxu0 0
  %562 = vmatpush1.bf16.msra.mxu0 %v543
  %563 = vmatprep.subr.bf16.mxu0 0
  %564 = vmatpush1.bf16.msra.mxu0 %v542
  %565 = vmatprep.subr.bf16.mxu0 0
  %566 = vmatpush1.bf16.msra.mxu0 %v541
  %567 = vmatprep.subr.bf16.mxu0 0
  %568 = vmatpush1.bf16.msra.mxu0 %v540
  %569 = vmatprep.subr.bf16.mxu0 0
  %570 = vmatpush1.bf16.msra.mxu0 %v539
  %571 = vmatprep.subr.bf16.mxu0 0
  %572 = vmatpush2.bf16.msra.mxu0 0
  %573 = vmatprep.subr.bf16.mxu0 0
  %574 = vmatpush2.bf16.msra.mxu0 0
  %575 = vmatprep.subr.bf16.mxu0 0
  %576 = vmatpush2.bf16.msra.mxu0 0
  %577 = vmatprep.subr.bf16.mxu0 0
  %578 = vmatpush2.bf16.msra.mxu0 0
  %579 = vmatprep.subr.bf16.mxu0 0
  %580 = vmatpush2.bf16.msra.mxu0 0
  %581 = vmatprep.subr.bf16.mxu0 0
  %582 = vmatpush2.bf16.msra.mxu0 0
  %583 = vmatprep.subr.bf16.mxu0 0
  %584 = vmatpush2.bf16.msra.mxu0 0
  %585 = vmatprep.subr.bf16.mxu0 0
  %586 = vmatpush2.bf16.msra.mxu0 0
  %587 = vmatprep.mubr.bf16.mxu0 0
  %588 = vmatmul.mubr.bf16.gmra.mxu0 %v503
  %v589 = vpop.f32.mrf.mxu0
  %v590 = vadd.f32 0.0, %v589
  %v591 = vpop.f32.mrf.mxu0
  %v592 = vpop.f32.mrf.mxu0
  %v593 = vadd.f32 0.0, %v592
  %v594 = vpop.f32.mrf.mxu0
  %595 = vmatprep.mubr.bf16.mxu0 0
  %596 = vmatmul.mubr.bf16.gmra.mxu0 %v504
  %v597 = vpop.f32.mrf.mxu0
  %v598 = vadd.f32 0.0, %v597
  %v599 = vpop.f32.mrf.mxu0
  %v600 = vpop.f32.mrf.mxu0
  %v601 = vadd.f32 0.0, %v600
  %v602 = vpop.f32.mrf.mxu0
  %603 = vdwg.mxu0
  %604 = vst [vmem:[#allocation2] sm:$0xff] %v590
  %605 = vst [vmem:[#allocation2 + $0x8] sm:$0xff] %v593
  %606 = vst [vmem:[#allocation2 + $0x10] sm:$0xff] %v598
  %607 = vst [vmem:[#allocation2 + $0x18] sm:$0xff] %v601
  %v608 = vld [vmem:[%s2] sm:$0xf]
  %v609 = vld [vmem:[%s2 + $0x4] sm:$0xf]
  %v610 = vld [vmem:[%s2 + $0x8] sm:$0xf]
  %v611 = vld [vmem:[%s2 + $0xc] sm:$0xf]
  %v612 = vld [vmem:[%s2 + $0x10] sm:$0xf]
  %v613 = vld [vmem:[%s2 + $0x14] sm:$0xf]
  %v614 = vld [vmem:[%s2 + $0x18] sm:$0xf]
  %v615 = vld [vmem:[%s2 + $0x1c] sm:$0xf]
  %v616 = vld [vmem:[%s2 + $0x20] sm:$0xf]
  %v617 = vld [vmem:[%s2 + $0x24] sm:$0xf]
  %v618 = vld [vmem:[%s2 + $0x28] sm:$0xf]
  %v619 = vld [vmem:[%s2 + $0x2c] sm:$0xf]
  %v620 = vld [vmem:[%s2 + $0x30] sm:$0xf]
  %v621 = vld [vmem:[%s2 + $0x34] sm:$0xf]
  %v622 = vld [vmem:[%s2 + $0x38] sm:$0xf]
  %v623 = vld [vmem:[%s2 + $0x3c] sm:$0xf]
  %v640 = vunpack.c.l.b16 %v608
  %v641 = vunpack.c.l.b16 %v609
  %v642 = vunpack.c.l.b16 %v610
  %v643 = vunpack.c.l.b16 %v611
  %v644 = vunpack.c.l.b16 %v612
  %v645 = vunpack.c.l.b16 %v613
  %v646 = vunpack.c.l.b16 %v614
  %v647 = vunpack.c.l.b16 %v615
  %v648 = vunpack.c.l.b16 %v616
  %v649 = vunpack.c.l.b16 %v617
  %v650 = vunpack.c.l.b16 %v618
  %v651 = vunpack.c.l.b16 %v619
  %v652 = vunpack.c.l.b16 %v620
  %v653 = vunpack.c.l.b16 %v621
  %v654 = vunpack.c.l.b16 %v622
  %v655 = vunpack.c.l.b16 %v623
  %v656 = vpack.c.b16 %v641, %v640
  %v657 = vpack.c.b16 %v643, %v642
  %v658 = vpack.c.b16 %v645, %v644
  %v659 = vpack.c.b16 %v647, %v646
  %v660 = vpack.c.b16 %v649, %v648
  %v661 = vpack.c.b16 %v651, %v650
  %v662 = vpack.c.b16 %v653, %v652
  %v663 = vpack.c.b16 %v655, %v654
  %672 = vmatprep.subr.bf16.mxu0 0
  %673 = vmatpush1.bf16.msra.mxu0 %v663
  %674 = vmatprep.subr.bf16.mxu0 0
  %675 = vmatpush1.bf16.msra.mxu0 %v662
  %676 = vmatprep.subr.bf16.mxu0 0
  %677 = vmatpush1.bf16.msra.mxu0 %v661
  %678 = vmatprep.subr.bf16.mxu0 0
  %679 = vmatpush1.bf16.msra.mxu0 %v660
  %680 = vmatprep.subr.bf16.mxu0 0
  %681 = vmatpush1.bf16.msra.mxu0 %v659
  %682 = vmatprep.subr.bf16.mxu0 0
  %683 = vmatpush1.bf16.msra.mxu0 %v658
  %684 = vmatprep.subr.bf16.mxu0 0
  %685 = vmatpush1.bf16.msra.mxu0 %v657
  %686 = vmatprep.subr.bf16.mxu0 0
  %687 = vmatpush1.bf16.msra.mxu0 %v656
  %688 = vmatprep.subr.bf16.mxu0 0
  %689 = vmatpush2.bf16.msra.mxu0 0
  %690 = vmatprep.subr.bf16.mxu0 0
  %691 = vmatpush2.bf16.msra.mxu0 0
  %692 = vmatprep.subr.bf16.mxu0 0
  %693 = vmatpush2.bf16.msra.mxu0 0
  %694 = vmatprep.subr.bf16.mxu0 0
  %695 = vmatpush2.bf16.msra.mxu0 0
  %696 = vmatprep.subr.bf16.mxu0 0
  %697 = vmatpush2.bf16.msra.mxu0 0
  %698 = vmatprep.subr.bf16.mxu0 0
  %699 = vmatpush2.bf16.msra.mxu0 0
  %700 = vmatprep.subr.bf16.mxu0 0
  %701 = vmatpush2.bf16.msra.mxu0 0
  %702 = vmatprep.subr.bf16.mxu0 0
  %703 = vmatpush2.bf16.msra.mxu0 0
  %704 = vmatprep.mubr.bf16.mxu0 0
  %705 = vmatmul.mubr.bf16.gmra.mxu0 %v503
  %v706 = vpop.f32.mrf.mxu0
  %v707 = vadd.f32 0.0, %v706
  %v708 = vpop.f32.mrf.mxu0
  %v709 = vpop.f32.mrf.mxu0
  %v710 = vadd.f32 0.0, %v709
  %v711 = vpop.f32.mrf.mxu0
  %712 = vmatprep.mubr.bf16.mxu0 0
  %713 = vmatmul.mubr.bf16.gmra.mxu0 %v504
  %v714 = vpop.f32.mrf.mxu0
  %v715 = vadd.f32 0.0, %v714
  %v716 = vpop.f32.mrf.mxu0
  %v717 = vpop.f32.mrf.mxu0
  %v718 = vadd.f32 0.0, %v717
  %v719 = vpop.f32.mrf.mxu0
  %720 = vdwg.mxu0
  %v721 = vld [vmem:[#allocation2] sm:$0xff]
  %v722 = vld [vmem:[#allocation2 + $0x8] sm:$0xff]
  %v723 = vld [vmem:[#allocation2 + $0x10] sm:$0xff]
  %v724 = vld [vmem:[#allocation2 + $0x18] sm:$0xff]
  %v725 = vrot.slane %v707, 7
  %v726 = vrot.slane %v710, 7
  %v727 = vrot.slane %v715, 7
  %v728 = vrot.slane %v718, 7
  %v729 = vsel %vm296, %v727, %v728
  %v730 = vsel %vm296, %v726, %v727
  %v731 = vsel %vm296, %v725, %v726
  %v732 = vsel %vm296, %v728, %v725
  %v733 = vmul.f32 %v732, %v82
  %v734 = vmul.f32 %v731, %v83
  %v735 = vmul.f32 %v730, %v84
  %v736 = vmul.f32 %v729, %v85
  %v737 = vadd.f32 %v721, %v733
  %v738 = vadd.f32 %v722, %v734
  %v739 = vadd.f32 %v723, %v735
  %v740 = vadd.f32 %v724, %v736
  %741 = vst [vmem:[#allocation2] sm:$0xff] %v737
  %742 = vst [vmem:[#allocation2 + $0x8] sm:$0xff] %v738
  %743 = vst [vmem:[#allocation2 + $0x10] sm:$0xff] %v739
  %744 = vst [vmem:[#allocation2 + $0x18] sm:$0xff] %v740
  %s745 = scalar_lea.vmem %s2, 128
  %v746 = vld [vmem:[%s745] sm:$0xf]
  %v747 = vld [vmem:[%s745 + $0x4] sm:$0xf]
  %v748 = vld [vmem:[%s745 + $0x8] sm:$0xf]
  %v749 = vld [vmem:[%s745 + $0xc] sm:$0xf]
  %v750 = vld [vmem:[%s745 + $0x10] sm:$0xf]
  %v751 = vld [vmem:[%s745 + $0x14] sm:$0xf]
  %v752 = vld [vmem:[%s745 + $0x18] sm:$0xf]
  %v753 = vld [vmem:[%s745 + $0x1c] sm:$0xf]
  %v754 = vld [vmem:[%s745 + $0x20] sm:$0xf]
  %v755 = vld [vmem:[%s745 + $0x24] sm:$0xf]
  %v756 = vld [vmem:[%s745 + $0x28] sm:$0xf]
  %v757 = vld [vmem:[%s745 + $0x2c] sm:$0xf]
  %v758 = vld [vmem:[%s745 + $0x30] sm:$0xf]
  %v759 = vld [vmem:[%s745 + $0x34] sm:$0xf]
  %v760 = vld [vmem:[%s745 + $0x38] sm:$0xf]
  %v761 = vld [vmem:[%s745 + $0x3c] sm:$0xf]
  %v778 = vunpack.c.l.b16 %v746
  %v779 = vunpack.c.l.b16 %v747
  %v780 = vunpack.c.l.b16 %v748
  %v781 = vunpack.c.l.b16 %v749
  %v782 = vunpack.c.l.b16 %v750
  %v783 = vunpack.c.l.b16 %v751
  %v784 = vunpack.c.l.b16 %v752
  %v785 = vunpack.c.l.b16 %v753
  %v786 = vunpack.c.l.b16 %v754
  %v787 = vunpack.c.l.b16 %v755
  %v788 = vunpack.c.l.b16 %v756
  %v789 = vunpack.c.l.b16 %v757
  %v790 = vunpack.c.l.b16 %v758
  %v791 = vunpack.c.l.b16 %v759
  %v792 = vunpack.c.l.b16 %v760
  %v793 = vunpack.c.l.b16 %v761
  %v794 = vpack.c.b16 %v779, %v778
  %v795 = vpack.c.b16 %v781, %v780
  %v796 = vpack.c.b16 %v783, %v782
  %v797 = vpack.c.b16 %v785, %v784
  %v798 = vpack.c.b16 %v787, %v786
  %v799 = vpack.c.b16 %v789, %v788
  %v800 = vpack.c.b16 %v791, %v790
  %v801 = vpack.c.b16 %v793, %v792
  %810 = vmatprep.subr.bf16.mxu0 0
  %811 = vmatpush1.bf16.msra.mxu0 %v801
  %812 = vmatprep.subr.bf16.mxu0 0
  %813 = vmatpush1.bf16.msra.mxu0 %v800
  %814 = vmatprep.subr.bf16.mxu0 0
  %815 = vmatpush1.bf16.msra.mxu0 %v799
  %816 = vmatprep.subr.bf16.mxu0 0
  %817 = vmatpush1.bf16.msra.mxu0 %v798
  %818 = vmatprep.subr.bf16.mxu0 0
  %819 = vmatpush1.bf16.msra.mxu0 %v797
  %820 = vmatprep.subr.bf16.mxu0 0
  %821 = vmatpush1.bf16.msra.mxu0 %v796
  %822 = vmatprep.subr.bf16.mxu0 0
  %823 = vmatpush1.bf16.msra.mxu0 %v795
  %824 = vmatprep.subr.bf16.mxu0 0
  %825 = vmatpush1.bf16.msra.mxu0 %v794
  %826 = vmatprep.subr.bf16.mxu0 0
  %827 = vmatpush2.bf16.msra.mxu0 0
  %828 = vmatprep.subr.bf16.mxu0 0
  %829 = vmatpush2.bf16.msra.mxu0 0
  %830 = vmatprep.subr.bf16.mxu0 0
  %831 = vmatpush2.bf16.msra.mxu0 0
  %832 = vmatprep.subr.bf16.mxu0 0
  %833 = vmatpush2.bf16.msra.mxu0 0
  %834 = vmatprep.subr.bf16.mxu0 0
  %835 = vmatpush2.bf16.msra.mxu0 0
  %836 = vmatprep.subr.bf16.mxu0 0
  %837 = vmatpush2.bf16.msra.mxu0 0
  %838 = vmatprep.subr.bf16.mxu0 0
  %839 = vmatpush2.bf16.msra.mxu0 0
  %840 = vmatprep.subr.bf16.mxu0 0
  %841 = vmatpush2.bf16.msra.mxu0 0
  %842 = vmatprep.mubr.bf16.mxu0 0
  %843 = vmatmul.mubr.bf16.gmra.mxu0 %v503
  %v844 = vpop.f32.mrf.mxu0
  %v845 = vadd.f32 0.0, %v844
  %v846 = vpop.f32.mrf.mxu0
  %v847 = vpop.f32.mrf.mxu0
  %v848 = vadd.f32 0.0, %v847
  %v849 = vpop.f32.mrf.mxu0
  %850 = vmatprep.mubr.bf16.mxu0 0
  %851 = vmatmul.mubr.bf16.gmra.mxu0 %v504
  %v852 = vpop.f32.mrf.mxu0
  %v853 = vadd.f32 0.0, %v852
  %v854 = vpop.f32.mrf.mxu0
  %v855 = vpop.f32.mrf.mxu0
  %v856 = vadd.f32 0.0, %v855
  %v857 = vpop.f32.mrf.mxu0
  %858 = vdwg.mxu0
  %v859 = vld [vmem:[#allocation2] sm:$0xff]
  %v860 = vld [vmem:[#allocation2 + $0x8] sm:$0xff]
  %v861 = vld [vmem:[#allocation2 + $0x10] sm:$0xff]
  %v862 = vld [vmem:[#allocation2 + $0x18] sm:$0xff]
  %v863 = vrot.slane %v845, 1
  %v864 = vrot.slane %v848, 1
  %v865 = vrot.slane %v853, 1
  %v866 = vrot.slane %v856, 1
  %v867 = vsel %vm403, %v865, %v866
  %v868 = vsel %vm403, %v864, %v865
  %v869 = vsel %vm403, %v863, %v864
  %v870 = vsel %vm403, %v866, %v863
  %v871 = vmul.f32 %v869, %v94
  %v872 = vmul.f32 %v868, %v95
  %v873 = vmul.f32 %v867, %v96
  %v874 = vmul.f32 %v870, %v97
  %v875 = vadd.f32 %v859, %v871
  %v876 = vadd.f32 %v860, %v872
  %v877 = vadd.f32 %v861, %v873
  %v878 = vadd.f32 %v862, %v874
  %879 = vst [vmem:[#allocation2] sm:$0xff] %v875
  %880 = vst [vmem:[#allocation2 + $0x8] sm:$0xff] %v876
  %881 = vst [vmem:[#allocation2 + $0x10] sm:$0xff] %v877
  %882 = vst [vmem:[#allocation2 + $0x18] sm:$0xff] %v878
  %v883 = vld [vmem:[#allocation2] sm:$0xff]
  %v884 = vld [vmem:[#allocation2 + $0x8] sm:$0xff]
  %v885 = vld [vmem:[#allocation2 + $0x10] sm:$0xff]
  %v886 = vld [vmem:[#allocation2 + $0x18] sm:$0xff]
  %v887 = vlaneseq
  %v888 = vshrl.u32 %v887, 7
  %v889 = vsub.s32 0, %v888
  %v890 = vrot.slane %v476, %v889
  %v891 = vmul.f32 %v883, %v890
  %v892 = vmul.f32 %v884, %v890
  %v893 = vmul.f32 %v885, %v890
  %v894 = vmul.f32 %v886, %v890
  %v895 = vlaneseq
  %v896 = vshrl.u32 %v895, 7
  %v897 = vsub.s32 0, %v896
  %v898 = vrot.slane %v477, %v897
  %v899 = vadd.f32 %v891, %v898
  %v900 = vadd.f32 %v892, %v898
  %v901 = vadd.f32 %v893, %v898
  %v902 = vadd.f32 %v894, %v898
  %v903 = vmax.f32 %v899, 0.0
  %v904 = vmax.f32 %v900, 0.0
  %v905 = vmax.f32 %v901, 0.0
  %v906 = vmax.f32 %v902, 0.0
  %v907 = vmin.f32 %v903, 6.0
  %v908 = vmin.f32 %v904, 6.0
  %v909 = vmin.f32 %v905, 6.0
  %v910 = vmin.f32 %v906, 6.0
  %v911 = vpack.c.bf16 %v908, %v907
  %v912 = vpack.c.bf16 %v910, %v909
  %v915 = vunpack.c.l.b16 %v911
  %v916 = vunpack.c.h.b16 %v911
  %v917 = vunpack.c.l.b16 %v912
  %v918 = vunpack.c.h.b16 %v912
  %v919 = vpack.c.b16 %v915, %v915
  %v920 = vpack.c.b16 %v916, %v916
  %v921 = vpack.c.b16 %v917, %v917
  %v922 = vpack.c.b16 %v918, %v918
  %927 = vst [vmem:[#allocation4] sm:$0xf] %v919
  %928 = vst [vmem:[#allocation4 + $0x4] sm:$0xf] %v920
  %929 = vst [vmem:[#allocation4 + $0x8] sm:$0xf] %v921
  %930 = vst [vmem:[#allocation4 + $0xc] sm:$0xf] %v922
  %v931 = vld [vmem:[#allocation4] sm:$0xf]
  %v932 = vld [vmem:[#allocation4 + $0x4] sm:$0xf]
  %v933 = vld [vmem:[#allocation4 + $0x8] sm:$0xf]
  %v934 = vld [vmem:[#allocation4 + $0xc] sm:$0xf]
  %v935 = vld [vmem:[%s4 + $0x4] sm:$0x1]
  %v936 = vld [vmem:[%s4 + $0x5] sm:$0x1]
  %s937 = scalar_lea.vmem %s3, 64
  %v938 = vld [vmem:[%s937] sm:$0xf]
  %v939 = vld [vmem:[%s937 + $0x4] sm:$0xf]
  %v940 = vld [vmem:[%s937 + $0x8] sm:$0xf]
  %v941 = vld [vmem:[%s937 + $0xc] sm:$0xf]
  %v942 = vld [vmem:[%s937 + $0x10] sm:$0xf]
  %v943 = vld [vmem:[%s937 + $0x14] sm:$0xf]
  %v944 = vld [vmem:[%s937 + $0x18] sm:$0xf]
  %v945 = vld [vmem:[%s937 + $0x1c] sm:$0xf]
  %v946 = vld [vmem:[%s937 + $0x20] sm:$0xf]
  %v947 = vld [vmem:[%s937 + $0x24] sm:$0xf]
  %v948 = vld [vmem:[%s937 + $0x28] sm:$0xf]
  %v949 = vld [vmem:[%s937 + $0x2c] sm:$0xf]
  %v950 = vld [vmem:[%s937 + $0x30] sm:$0xf]
  %v951 = vld [vmem:[%s937 + $0x34] sm:$0xf]
  %v952 = vld [vmem:[%s937 + $0x38] sm:$0xf]
  %v953 = vld [vmem:[%s937 + $0x3c] sm:$0xf]
  %v958 = vunpack.c.l.b16 %v931
  %v959 = vunpack.c.l.b16 %v932
  %v960 = vunpack.c.l.b16 %v933
  %v961 = vunpack.c.l.b16 %v934
  %v962 = vpack.c.b16 %v959, %v958
  %v963 = vpack.c.b16 %v961, %v960
  %v982 = vunpack.c.l.b16 %v938
  %v983 = vunpack.c.l.b16 %v939
  %v984 = vunpack.c.l.b16 %v940
  %v985 = vunpack.c.l.b16 %v941
  %v986 = vunpack.c.l.b16 %v942
  %v987 = vunpack.c.l.b16 %v943
  %v988 = vunpack.c.l.b16 %v944
  %v989 = vunpack.c.l.b16 %v945
  %v990 = vunpack.c.l.b16 %v946
  %v991 = vunpack.c.l.b16 %v947
  %v992 = vunpack.c.l.b16 %v948
  %v993 = vunpack.c.l.b16 %v949
  %v994 = vunpack.c.l.b16 %v950
  %v995 = vunpack.c.l.b16 %v951
  %v996 = vunpack.c.l.b16 %v952
  %v997 = vunpack.c.l.b16 %v953
  %v998 = vpack.c.b16 %v983, %v982
  %v999 = vpack.c.b16 %v985, %v984
  %v1000 = vpack.c.b16 %v987, %v986
  %v1001 = vpack.c.b16 %v989, %v988
  %v1002 = vpack.c.b16 %v991, %v990
  %v1003 = vpack.c.b16 %v993, %v992
  %v1004 = vpack.c.b16 %v995, %v994
  %v1005 = vpack.c.b16 %v997, %v996
  %1014 = vmatprep.subr.bf16.mxu0 0
  %1015 = vmatpush1.bf16.msra.mxu0 %v1005
  %1016 = vmatprep.subr.bf16.mxu0 0
  %1017 = vmatpush1.bf16.msra.mxu0 %v1004
  %1018 = vmatprep.subr.bf16.mxu0 0
  %1019 = vmatpush1.bf16.msra.mxu0 %v1003
  %1020 = vmatprep.subr.bf16.mxu0 0
  %1021 = vmatpush1.bf16.msra.mxu0 %v1002
  %1022 = vmatprep.subr.bf16.mxu0 0
  %1023 = vmatpush1.bf16.msra.mxu0 %v1001
  %1024 = vmatprep.subr.bf16.mxu0 0
  %1025 = vmatpush1.bf16.msra.mxu0 %v1000
  %1026 = vmatprep.subr.bf16.mxu0 0
  %1027 = vmatpush1.bf16.msra.mxu0 %v999
  %1028 = vmatprep.subr.bf16.mxu0 0
  %1029 = vmatpush1.bf16.msra.mxu0 %v998
  %1030 = vmatprep.subr.bf16.mxu0 0
  %1031 = vmatpush2.bf16.msra.mxu0 0
  %1032 = vmatprep.subr.bf16.mxu0 0
  %1033 = vmatpush2.bf16.msra.mxu0 0
  %1034 = vmatprep.subr.bf16.mxu0 0
  %1035 = vmatpush2.bf16.msra.mxu0 0
  %1036 = vmatprep.subr.bf16.mxu0 0
  %1037 = vmatpush2.bf16.msra.mxu0 0
  %1038 = vmatprep.subr.bf16.mxu0 0
  %1039 = vmatpush2.bf16.msra.mxu0 0
  %1040 = vmatprep.subr.bf16.mxu0 0
  %1041 = vmatpush2.bf16.msra.mxu0 0
  %1042 = vmatprep.subr.bf16.mxu0 0
  %1043 = vmatpush2.bf16.msra.mxu0 0
  %1044 = vmatprep.subr.bf16.mxu0 0
  %1045 = vmatpush2.bf16.msra.mxu0 0
  %1046 = vmatprep.mubr.bf16.mxu0 0
  %1047 = vmatmul.mubr.bf16.gmra.mxu0 %v962
  %v1048 = vpop.f32.mrf.mxu0
  %v1049 = vadd.f32 0.0, %v1048
  %v1050 = vpop.f32.mrf.mxu0
  %v1051 = vpop.f32.mrf.mxu0
  %v1052 = vadd.f32 0.0, %v1051
  %v1053 = vpop.f32.mrf.mxu0
  %1054 = vmatprep.mubr.bf16.mxu0 0
  %1055 = vmatmul.mubr.bf16.gmra.mxu0 %v963
  %v1056 = vpop.f32.mrf.mxu0
  %v1057 = vadd.f32 0.0, %v1056
  %v1058 = vpop.f32.mrf.mxu0
  %v1059 = vpop.f32.mrf.mxu0
  %v1060 = vadd.f32 0.0, %v1059
  %v1061 = vpop.f32.mrf.mxu0
  %1062 = vdwg.mxu0
  %1063 = vst [vmem:[#allocation2] sm:$0xff] %v1049
  %1064 = vst [vmem:[#allocation2 + $0x8] sm:$0xff] %v1052
  %1065 = vst [vmem:[#allocation2 + $0x10] sm:$0xff] %v1057
  %1066 = vst [vmem:[#allocation2 + $0x18] sm:$0xff] %v1060
  %v1067 = vld [vmem:[%s3] sm:$0xf]
  %v1068 = vld [vmem:[%s3 + $0x4] sm:$0xf]
  %v1069 = vld [vmem:[%s3 + $0x8] sm:$0xf]
  %v1070 = vld [vmem:[%s3 + $0xc] sm:$0xf]
  %v1071 = vld [vmem:[%s3 + $0x10] sm:$0xf]
  %v1072 = vld [vmem:[%s3 + $0x14] sm:$0xf]
  %v1073 = vld [vmem:[%s3 + $0x18] sm:$0xf]
  %v1074 = vld [vmem:[%s3 + $0x1c] sm:$0xf]
  %v1075 = vld [vmem:[%s3 + $0x20] sm:$0xf]
  %v1076 = vld [vmem:[%s3 + $0x24] sm:$0xf]
  %v1077 = vld [vmem:[%s3 + $0x28] sm:$0xf]
  %v1078 = vld [vmem:[%s3 + $0x2c] sm:$0xf]
  %v1079 = vld [vmem:[%s3 + $0x30] sm:$0xf]
  %v1080 = vld [vmem:[%s3 + $0x34] sm:$0xf]
  %v1081 = vld [vmem:[%s3 + $0x38] sm:$0xf]
  %v1082 = vld [vmem:[%s3 + $0x3c] sm:$0xf]
  %v1099 = vunpack.c.l.b16 %v1067
  %v1100 = vunpack.c.l.b16 %v1068
  %v1101 = vunpack.c.l.b16 %v1069
  %v1102 = vunpack.c.l.b16 %v1070
  %v1103 = vunpack.c.l.b16 %v1071
  %v1104 = vunpack.c.l.b16 %v1072
  %v1105 = vunpack.c.l.b16 %v1073
  %v1106 = vunpack.c.l.b16 %v1074
  %v1107 = vunpack.c.l.b16 %v1075
  %v1108 = vunpack.c.l.b16 %v1076
  %v1109 = vunpack.c.l.b16 %v1077
  %v1110 = vunpack.c.l.b16 %v1078
  %v1111 = vunpack.c.l.b16 %v1079
  %v1112 = vunpack.c.l.b16 %v1080
  %v1113 = vunpack.c.l.b16 %v1081
  %v1114 = vunpack.c.l.b16 %v1082
  %v1115 = vpack.c.b16 %v1100, %v1099
  %v1116 = vpack.c.b16 %v1102, %v1101
  %v1117 = vpack.c.b16 %v1104, %v1103
  %v1118 = vpack.c.b16 %v1106, %v1105
  %v1119 = vpack.c.b16 %v1108, %v1107
  %v1120 = vpack.c.b16 %v1110, %v1109
  %v1121 = vpack.c.b16 %v1112, %v1111
  %v1122 = vpack.c.b16 %v1114, %v1113
  %1131 = vmatprep.subr.bf16.mxu0 0
  %1132 = vmatpush1.bf16.msra.mxu0 %v1122
  %1133 = vmatprep.subr.bf16.mxu0 0
  %1134 = vmatpush1.bf16.msra.mxu0 %v1121
  %1135 = vmatprep.subr.bf16.mxu0 0
  %1136 = vmatpush1.bf16.msra.mxu0 %v1120
  %1137 = vmatprep.subr.bf16.mxu0 0
  %1138 = vmatpush1.bf16.msra.mxu0 %v1119
  %1139 = vmatprep.subr.bf16.mxu0 0
  %1140 = vmatpush1.bf16.msra.mxu0 %v1118
  %1141 = vmatprep.subr.bf16.mxu0 0
  %1142 = vmatpush1.bf16.msra.mxu0 %v1117
  %1143 = vmatprep.subr.bf16.mxu0 0
  %1144 = vmatpush1.bf16.msra.mxu0 %v1116
  %1145 = vmatprep.subr.bf16.mxu0 0
  %1146 = vmatpush1.bf16.msra.mxu0 %v1115
  %1147 = vmatprep.subr.bf16.mxu0 0
  %1148 = vmatpush2.bf16.msra.mxu0 0
  %1149 = vmatprep.subr.bf16.mxu0 0
  %1150 = vmatpush2.bf16.msra.mxu0 0
  %1151 = vmatprep.subr.bf16.mxu0 0
  %1152 = vmatpush2.bf16.msra.mxu0 0
  %1153 = vmatprep.subr.bf16.mxu0 0
  %1154 = vmatpush2.bf16.msra.mxu0 0
  %1155 = vmatprep.subr.bf16.mxu0 0
  %1156 = vmatpush2.bf16.msra.mxu0 0
  %1157 = vmatprep.subr.bf16.mxu0 0
  %1158 = vmatpush2.bf16.msra.mxu0 0
  %1159 = vmatprep.subr.bf16.mxu0 0
  %1160 = vmatpush2.bf16.msra.mxu0 0
  %1161 = vmatprep.subr.bf16.mxu0 0
  %1162 = vmatpush2.bf16.msra.mxu0 0
  %1163 = vmatprep.mubr.bf16.mxu0 0
  %1164 = vmatmul.mubr.bf16.gmra.mxu0 %v962
  %v1165 = vpop.f32.mrf.mxu0
  %v1166 = vadd.f32 0.0, %v1165
  %v1167 = vpop.f32.mrf.mxu0
  %v1168 = vpop.f32.mrf.mxu0
  %v1169 = vadd.f32 0.0, %v1168
  %v1170 = vpop.f32.mrf.mxu0
  %1171 = vmatprep.mubr.bf16.mxu0 0
  %1172 = vmatmul.mubr.bf16.gmra.mxu0 %v963
  %v1173 = vpop.f32.mrf.mxu0
  %v1174 = vadd.f32 0.0, %v1173
  %v1175 = vpop.f32.mrf.mxu0
  %v1176 = vpop.f32.mrf.mxu0
  %v1177 = vadd.f32 0.0, %v1176
  %v1178 = vpop.f32.mrf.mxu0
  %1179 = vdwg.mxu0
  %v1180 = vld [vmem:[#allocation2] sm:$0xff]
  %v1181 = vld [vmem:[#allocation2 + $0x8] sm:$0xff]
  %v1182 = vld [vmem:[#allocation2 + $0x10] sm:$0xff]
  %v1183 = vld [vmem:[#allocation2 + $0x18] sm:$0xff]
  %v1184 = vrot.slane %v1166, 7
  %v1185 = vrot.slane %v1169, 7
  %v1186 = vrot.slane %v1174, 7
  %v1187 = vrot.slane %v1177, 7
  %v1188 = vsel %vm296, %v1186, %v1187
  %v1189 = vsel %vm296, %v1185, %v1186
  %v1190 = vsel %vm296, %v1184, %v1185
  %v1191 = vsel %vm296, %v1187, %v1184
  %v1192 = vmul.f32 %v1191, %v82
  %v1193 = vmul.f32 %v1190, %v83
  %v1194 = vmul.f32 %v1189, %v84
  %v1195 = vmul.f32 %v1188, %v85
  %v1196 = vadd.f32 %v1180, %v1192
  %v1197 = vadd.f32 %v1181, %v1193
  %v1198 = vadd.f32 %v1182, %v1194
  %v1199 = vadd.f32 %v1183, %v1195
  %1200 = vst [vmem:[#allocation2] sm:$0xff] %v1196
  %1201 = vst [vmem:[#allocation2 + $0x8] sm:$0xff] %v1197
  %1202 = vst [vmem:[#allocation2 + $0x10] sm:$0xff] %v1198
  %1203 = vst [vmem:[#allocation2 + $0x18] sm:$0xff] %v1199
  %s1204 = scalar_lea.vmem %s3, 128
  %v1205 = vld [vmem:[%s1204] sm:$0xf]
  %v1206 = vld [vmem:[%s1204 + $0x4] sm:$0xf]
  %v1207 = vld [vmem:[%s1204 + $0x8] sm:$0xf]
  %v1208 = vld [vmem:[%s1204 + $0xc] sm:$0xf]
  %v1209 = vld [vmem:[%s1204 + $0x10] sm:$0xf]
  %v1210 = vld [vmem:[%s1204 + $0x14] sm:$0xf]
  %v1211 = vld [vmem:[%s1204 + $0x18] sm:$0xf]
  %v1212 = vld [vmem:[%s1204 + $0x1c] sm:$0xf]
  %v1213 = vld [vmem:[%s1204 + $0x20] sm:$0xf]
  %v1214 = vld [vmem:[%s1204 + $0x24] sm:$0xf]
  %v1215 = vld [vmem:[%s1204 + $0x28] sm:$0xf]
  %v1216 = vld [vmem:[%s1204 + $0x2c] sm:$0xf]
  %v1217 = vld [vmem:[%s1204 + $0x30] sm:$0xf]
  %v1218 = vld [vmem:[%s1204 + $0x34] sm:$0xf]
  %v1219 = vld [vmem:[%s1204 + $0x38] sm:$0xf]
  %v1220 = vld [vmem:[%s1204 + $0x3c] sm:$0xf]
  %v1237 = vunpack.c.l.b16 %v1205
  %v1238 = vunpack.c.l.b16 %v1206
  %v1239 = vunpack.c.l.b16 %v1207
  %v1240 = vunpack.c.l.b16 %v1208
  %v1241 = vunpack.c.l.b16 %v1209
  %v1242 = vunpack.c.l.b16 %v1210
  %v1243 = vunpack.c.l.b16 %v1211
  %v1244 = vunpack.c.l.b16 %v1212
  %v1245 = vunpack.c.l.b16 %v1213
  %v1246 = vunpack.c.l.b16 %v1214
  %v1247 = vunpack.c.l.b16 %v1215
  %v1248 = vunpack.c.l.b16 %v1216
  %v1249 = vunpack.c.l.b16 %v1217
  %v1250 = vunpack.c.l.b16 %v1218
  %v1251 = vunpack.c.l.b16 %v1219
  %v1252 = vunpack.c.l.b16 %v1220
  %v1253 = vpack.c.b16 %v1238, %v1237
  %v1254 = vpack.c.b16 %v1240, %v1239
  %v1255 = vpack.c.b16 %v1242, %v1241
  %v1256 = vpack.c.b16 %v1244, %v1243
  %v1257 = vpack.c.b16 %v1246, %v1245
  %v1258 = vpack.c.b16 %v1248, %v1247
  %v1259 = vpack.c.b16 %v1250, %v1249
  %v1260 = vpack.c.b16 %v1252, %v1251
  %1269 = vmatprep.subr.bf16.mxu0 0
  %1270 = vmatpush1.bf16.msra.mxu0 %v1260
  %1271 = vmatprep.subr.bf16.mxu0 0
  %1272 = vmatpush1.bf16.msra.mxu0 %v1259
  %1273 = vmatprep.subr.bf16.mxu0 0
  %1274 = vmatpush1.bf16.msra.mxu0 %v1258
  %1275 = vmatprep.subr.bf16.mxu0 0
  %1276 = vmatpush1.bf16.msra.mxu0 %v1257
  %1277 = vmatprep.subr.bf16.mxu0 0
  %1278 = vmatpush1.bf16.msra.mxu0 %v1256
  %1279 = vmatprep.subr.bf16.mxu0 0
  %1280 = vmatpush1.bf16.msra.mxu0 %v1255
  %1281 = vmatprep.subr.bf16.mxu0 0
  %1282 = vmatpush1.bf16.msra.mxu0 %v1254
  %1283 = vmatprep.subr.bf16.mxu0 0
  %1284 = vmatpush1.bf16.msra.mxu0 %v1253
  %1285 = vmatprep.subr.bf16.mxu0 0
  %1286 = vmatpush2.bf16.msra.mxu0 0
  %1287 = vmatprep.subr.bf16.mxu0 0
  %1288 = vmatpush2.bf16.msra.mxu0 0
  %1289 = vmatprep.subr.bf16.mxu0 0
  %1290 = vmatpush2.bf16.msra.mxu0 0
  %1291 = vmatprep.subr.bf16.mxu0 0
  %1292 = vmatpush2.bf16.msra.mxu0 0
  %1293 = vmatprep.subr.bf16.mxu0 0
  %1294 = vmatpush2.bf16.msra.mxu0 0
  %1295 = vmatprep.subr.bf16.mxu0 0
  %1296 = vmatpush2.bf16.msra.mxu0 0
  %1297 = vmatprep.subr.bf16.mxu0 0
  %1298 = vmatpush2.bf16.msra.mxu0 0
  %1299 = vmatprep.subr.bf16.mxu0 0
  %1300 = vmatpush2.bf16.msra.mxu0 0
  %1301 = vmatprep.mubr.bf16.mxu0 0
  %1302 = vmatmul.mubr.bf16.gmra.mxu0 %v962
  %v1303 = vpop.f32.mrf.mxu0
  %v1304 = vadd.f32 0.0, %v1303
  %v1305 = vpop.f32.mrf.mxu0
  %v1306 = vpop.f32.mrf.mxu0
  %v1307 = vadd.f32 0.0, %v1306
  %v1308 = vpop.f32.mrf.mxu0
  %1309 = vmatprep.mubr.bf16.mxu0 0
  %1310 = vmatmul.mubr.bf16.gmra.mxu0 %v963
  %v1311 = vpop.f32.mrf.mxu0
  %v1312 = vadd.f32 0.0, %v1311
  %v1313 = vpop.f32.mrf.mxu0
  %v1314 = vpop.f32.mrf.mxu0
  %v1315 = vadd.f32 0.0, %v1314
  %v1316 = vpop.f32.mrf.mxu0
  %1317 = vdwg.mxu0
  %v1318 = vld [vmem:[#allocation2] sm:$0xff]
  %v1319 = vld [vmem:[#allocation2 + $0x8] sm:$0xff]
  %v1320 = vld [vmem:[#allocation2 + $0x10] sm:$0xff]
  %v1321 = vld [vmem:[#allocation2 + $0x18] sm:$0xff]
  %v1322 = vrot.slane %v1304, 1
  %v1323 = vrot.slane %v1307, 1
  %v1324 = vrot.slane %v1312, 1
  %v1325 = vrot.slane %v1315, 1
  %v1326 = vsel %vm403, %v1324, %v1325
  %v1327 = vsel %vm403, %v1323, %v1324
  %v1328 = vsel %vm403, %v1322, %v1323
  %v1329 = vsel %vm403, %v1325, %v1322
  %v1330 = vmul.f32 %v1328, %v94
  %v1331 = vmul.f32 %v1327, %v95
  %v1332 = vmul.f32 %v1326, %v96
  %v1333 = vmul.f32 %v1329, %v97
  %v1334 = vadd.f32 %v1318, %v1330
  %v1335 = vadd.f32 %v1319, %v1331
  %v1336 = vadd.f32 %v1320, %v1332
  %v1337 = vadd.f32 %v1321, %v1333
  %1338 = vst [vmem:[#allocation2] sm:$0xff] %v1334
  %1339 = vst [vmem:[#allocation2 + $0x8] sm:$0xff] %v1335
  %1340 = vst [vmem:[#allocation2 + $0x10] sm:$0xff] %v1336
  %1341 = vst [vmem:[#allocation2 + $0x18] sm:$0xff] %v1337
  %v1342 = vld [vmem:[#allocation2] sm:$0xff]
  %v1343 = vld [vmem:[#allocation2 + $0x8] sm:$0xff]
  %v1344 = vld [vmem:[#allocation2 + $0x10] sm:$0xff]
  %v1345 = vld [vmem:[#allocation2 + $0x18] sm:$0xff]
  %v1346 = vlaneseq
  %v1347 = vshrl.u32 %v1346, 7
  %v1348 = vsub.s32 0, %v1347
  %v1349 = vrot.slane %v935, %v1348
  %v1350 = vmul.f32 %v1342, %v1349
  %v1351 = vmul.f32 %v1343, %v1349
  %v1352 = vmul.f32 %v1344, %v1349
  %v1353 = vmul.f32 %v1345, %v1349
  %v1354 = vlaneseq
  %v1355 = vshrl.u32 %v1354, 7
  %v1356 = vsub.s32 0, %v1355
  %v1357 = vrot.slane %v936, %v1356
  %v1358 = vadd.f32 %v1350, %v1357
  %v1359 = vadd.f32 %v1351, %v1357
  %v1360 = vadd.f32 %v1352, %v1357
  %v1361 = vadd.f32 %v1353, %v1357
  %v1362 = vmax.f32 %v1358, 0.0
  %v1363 = vmax.f32 %v1359, 0.0
  %v1364 = vmax.f32 %v1360, 0.0
  %v1365 = vmax.f32 %v1361, 0.0
  %v1366 = vmin.f32 %v1362, 6.0
  %v1367 = vmin.f32 %v1363, 6.0
  %v1368 = vmin.f32 %v1364, 6.0
  %v1369 = vmin.f32 %v1365, 6.0
  %v1370 = vld [vmem:[#allocation3] sm:$0xff]
  %v1371 = vld [vmem:[#allocation3 + $0x8] sm:$0xff]
  %v1372 = vld [vmem:[#allocation3 + $0x10] sm:$0xff]
  %v1373 = vld [vmem:[#allocation3 + $0x18] sm:$0xff]
  %v1374 = vadd.f32 %v1366, %v1370
  %v1375 = vadd.f32 %v1367, %v1371
  %v1376 = vadd.f32 %v1368, %v1372
  %v1377 = vadd.f32 %v1369, %v1373
  %v1378 = vmax.f32 %v1374, 0.0
  %v1379 = vmax.f32 %v1375, 0.0
  %v1380 = vmax.f32 %v1376, 0.0
  %v1381 = vmax.f32 %v1377, 0.0
  %v1382 = vmin.f32 %v1378, 6.0
  %v1383 = vmin.f32 %v1379, 6.0
  %v1384 = vmin.f32 %v1380, 6.0
  %v1385 = vmin.f32 %v1381, 6.0
  %v1386 = vpack.c.bf16 %v1383, %v1382
  %v1387 = vpack.c.bf16 %v1385, %v1384
  %v1390 = vunpack.c.l.b16 %v1386
  %v1391 = vunpack.c.h.b16 %v1386
  %v1392 = vunpack.c.l.b16 %v1387
  %v1393 = vunpack.c.h.b16 %v1387
  %v1394 = vpack.c.b16 %v1390, %v1390
  %v1395 = vpack.c.b16 %v1391, %v1391
  %v1396 = vpack.c.b16 %v1392, %v1392
  %v1397 = vpack.c.b16 %v1393, %v1393
  %1402 = vst [vmem:[%s5] sm:$0xf] %v1394
  %1403 = vst [vmem:[%s5 + $0x4] sm:$0xf] %v1395
  %1404 = vst [vmem:[%s5 + $0x8] sm:$0xf] %v1396
  %1405 = vst [vmem:[%s5 + $0xc] sm:$0xf] %v1397
  // Predicated region
  $region22: #{res_block_forward.1} parent=0 // pred_check
    _
  $region23: #{res_block_forward.1} parent=0 // pred_check_branch
    %1407 = sbr.rel (0) target = $region25
  $region24: #{res_block_forward.1} parent=0 // pred_region
    _
  $region25: #{res_block_forward.1} parent=0 // pred_fallthru
    _
  // Predicated region
  $region26: #{res_block_forward.1} parent=0 // pred_check
    _
  $region27: #{res_block_forward.1} parent=0 // pred_check_branch
    %1409 = sbr.rel (0) target = $region29
  $region28: #{res_block_forward.1} parent=0 // pred_region
    _
  $region29: #{res_block_forward.1} parent=0 // pred_fallthru
    _

</llo_original>
